<compile_context>
chip_gen: v7x
topology: tpu7x:2x2x1
jax: 0.10.0
libtpu: 0.0.40
codegen_flags: <defaults>
</compile_context>

<pallas_src>
import jax
import jax.numpy as jnp
from jax import lax
from jax.experimental import pallas as pl
from jax.experimental.pallas import tpu as pltpu

K = 17      # conv1x17 kernel size
PAD = 1     # conv1x17 padding
SHRINK = K - 2 * PAD - 1   # length lost per conv = 14


def _choose_b_tile(n):
    """Default batch-block (lane interleave) factor.

    B a multiple of 128 is the biggest single lever: every im2col tap offset
    k*B becomes 128-aligned and the output lane width L2*B becomes a multiple
    of 128 (lane-dense unmasked stores).  When the batch is too small for
    that, prefer >= 2 grid steps (pipelining + v7x megacore).
    """
    if n % 128 == 0:
        return 128
    if n % 2 == 0 and n > 1:
        return n // 2
    return n


def basic_block_1x17(x, p, *, b_tile=None):
    """x: (N, C, L) float32 -> (N, C, L - 28) float32 (BN in eval mode)."""
    N, C, L = x.shape
    L1 = L - SHRINK
    L2 = L1 - SHRINK
    Lp = L + 2 * PAD
    assert L2 >= 2, "sequence too short for two conv1x17 layers"

    if b_tile is None:
        b_tile = _choose_b_tile(N)
    assert N % b_tile == 0, "batch must be divisible by b_tile"
    B = b_tile
    NB = N // B

    # ---------------- host-side layout (plumbing) ----------------------------
    # interleaved layout (NB, C, Lp*B), lane = l_padded*B + b; conv1 padding
    # baked in as zero lanes at l_padded in {0, Lp-1}.
    xt = x.reshape(NB, B, C, L).transpose(0, 2, 3, 1)          # (NB, C, L, B)
    xt = jnp.pad(xt, ((0, 0), (0, 0), (PAD, PAD), (0, 0)))     # (NB, C, Lp, B)
    x_f = xt.reshape(NB, C, Lp * B)

    # ---------------- parameter prep ------------------------------------------
    # BN scales folded into conv weights (per output channel); im2col row order
    # k*Cin + i; bf16 MXU inputs.
    def prep_w(w):                                             # (Cout, Cin, K)
        return jnp.transpose(w, (0, 2, 1)).reshape(C, K * C)
    w1_eff = p["s1"][:, None, None] * p["w1"]
    w2_eff = p["s2"][:, None, None] * p["w2"]
    wconv = jnp.stack([prep_w(w1_eff), prep_w(w2_eff)]).astype(jnp.bfloat16)

    # FC gate with its BatchNorm folded into the first Linear.
    fw1_eff = p["fs"][:, None] * p["fw1"]
    fb1_eff = p["fs"] * p["fb1"] + p["fbb"]
    wfc = jnp.stack([fw1_eff, p["fw2"]]).astype(jnp.bfloat16)  # (2, C, C)

    # remaining per-channel biases: [bn1_bias, bn2_bias, fc1_bias, fc2_bias]
    pvec = jnp.stack([p["b1"], p["b2"], fb1_eff, p["fb2"]],
                     axis=1).astype(jnp.float32)               # (C, 4)

    # 0/1 GAP selection matrix over the interleaved lane axis (bf16, unscaled;
    # the exact 1/L2 scale is applied after the dot).
    lane_mod = jnp.arange(L2 * B, dtype=jnp.int32) % B
    gap01 = (lane_mod[:, None] ==
             jnp.arange(B, dtype=jnp.int32)[None, :]).astype(jnp.bfloat16)

    inv_l2 = 1.0 / float(L2)

    # ---------------- Pallas kernel ------------------------------------------
    def kernel(x_ref, wconv_ref, wfc_ref, pvec_ref, gap_ref, o_ref):
        xp = x_ref[...]                                        # (C, Lp*B) f32
        xb = xp.astype(jnp.bfloat16)

        # conv1 (im2col -> single bf16 MXU matmul, f32 acc) + bias + relu.
        cols1 = jnp.concatenate(
            [xb[:, k * B: k * B + L1 * B] for k in range(K)], axis=0)
        h1 = jnp.dot(wconv_ref[0], cols1,
                     preferred_element_type=jnp.float32)       # (C, L1*B)
        h1 = jnp.maximum(h1 + pvec_ref[:, 0:1], 0.0)

        # conv2: cols built directly from the bf16 activation (no scratch
        # round-trip); zero padding only touches taps 0 and K-1.
        h1b = h1.astype(jnp.bfloat16)
        zpad = jnp.zeros((C, B), jnp.bfloat16)
        taps = [jnp.concatenate([zpad, h1b[:, :(L2 - 1) * B]], axis=1)]
        taps += [h1b[:, (k - 1) * B: (k - 1 + L2) * B] for k in range(1, K - 1)]
        taps.append(jnp.concatenate(
            [h1b[:, (K - 2) * B: (K - 2 + L2 - 1) * B], zpad], axis=1))
        cols2 = jnp.concatenate(taps, axis=0)                  # (K*C, L2*B)
        h2 = jnp.dot(wconv_ref[1], cols2,
                     preferred_element_type=jnp.float32)       # (C, L2*B)
        h2 = h2 + pvec_ref[:, 1:2]

        # Shrinkage: GAP(|h2|) -> fc1(+bn folded) -> relu -> fc2 -> sigmoid.
        avg = jnp.dot(jnp.abs(h2).astype(jnp.bfloat16), gap_ref[...],
                      preferred_element_type=jnp.float32) * inv_l2   # (C, B)
        z = jnp.dot(wfc_ref[0], avg.astype(jnp.bfloat16),
                    preferred_element_type=jnp.float32) + pvec_ref[:, 2:3]
        z = jnp.maximum(z, 0.0)
        z = jnp.dot(wfc_ref[1], z.astype(jnp.bfloat16),
                    preferred_element_type=jnp.float32) + pvec_ref[:, 3:4]
        t = avg * jax.nn.sigmoid(z)                            # (C, B)

        # Broadcast t along l (lane = l*B + b): the layout has period B along
        # lanes, so any length-(L2*B) prefix of a repeated lane tiling of t is
        # the correct broadcast -> log2(L2) lane concats, no dense matrix.
        t_full = t
        while t_full.shape[1] < L2 * B:
            t_full = jnp.concatenate([t_full, t_full], axis=1)
        t_full = t_full[:, :L2 * B]

        # Soft thresholding.
        out = h2 + 0.5 * (jnp.sqrt((h2 - t_full) ** 2 + 0.003)
                          - jnp.sqrt((h2 + t_full) ** 2 + 0.003))

        # Residual crop (original l in [0, L2)) + add + relu; f32 residual.
        res = xp[:, PAD * B: (L2 + PAD) * B]
        o_ref[...] = jnp.maximum(res + out, 0.0).astype(o_ref.dtype)

    # per-step VMEM footprint -> scoped VMEM limit (capped for v7x's 64 MiB).
    est = (2 * C * Lp * B * 4          # input block (double-buffered)
           + 2 * C * L2 * B * 4        # output block (double-buffered)
           + K * C * L1 * B * 2        # cols1 (bf16)
           + K * C * L2 * B * 2        # cols2 (bf16)
           + 4 * C * L1 * B * 4        # h1 / h2 / t_full / slack (f32)
           + 2 * C * K * C * 2 + 2 * C * C * 2
           + L2 * B * B * 2 + C * 4 * 4)
    vmem_limit = int(min(max(2 * est, 32 * 1024 * 1024), 64 * 1024 * 1024))

    out_f = pl.pallas_call(
        kernel,
        out_shape=jax.ShapeDtypeStruct((NB, C, L2 * B), jnp.float32),
        grid_spec=pltpu.PrefetchScalarGridSpec(
            num_scalar_prefetch=0,
            grid=(NB,),
            in_specs=[
                pl.BlockSpec((None, C, Lp * B), lambda g: (g, 0, 0)),  # x block
                pl.BlockSpec((2, C, K * C), lambda g: (0, 0, 0)),      # conv w
                pl.BlockSpec((2, C, C), lambda g: (0, 0, 0)),          # fc w
                pl.BlockSpec((C, 4), lambda g: (0, 0)),                # biases
                pl.BlockSpec((L2 * B, B), lambda g: (0, 0)),           # gap 0/1
            ],
            out_specs=pl.BlockSpec((None, C, L2 * B), lambda g: (g, 0, 0)),
        ),
        compiler_params=pltpu.CompilerParams(
            dimension_semantics=("parallel",),
            vmem_limit_bytes=vmem_limit,
        ),
    )(x_f, wconv, wfc, pvec, gap01)

    # un-interleave back to (N, C, L2)
    return (out_f.reshape(NB, C, L2, B)
                 .transpose(0, 3, 1, 2)
                 .reshape(N, C, L2))


def make_params(key, C):
    ks = jax.random.split(key, 4)
    eps = 1e-5

    def fold_bn(gamma, beta, mean, var):
        scale = gamma / jnp.sqrt(var + eps)
        return scale, beta - mean * scale

    ar = jnp.arange(C, dtype=jnp.float32)
    # conv BN params (deterministic)
    g1, be1, m1, v1 = 1.0 + 0.05 * ar, 0.02 * ar, 0.01 * ar, 1.0 + 0.03 * ar
    g2, be2, m2, v2 = 1.0 - 0.02 * ar, -0.01 * ar, 0.02 * ar, 1.0 + 0.05 * ar
    # fc BN params
    gf, bef, mf, vf = 1.0 + 0.01 * ar, 0.03 * ar, -0.01 * ar, 1.0 + 0.02 * ar

    s1, b1 = fold_bn(g1, be1, m1, v1)
    s2, b2 = fold_bn(g2, be2, m2, v2)
    fs, fbb = fold_bn(gf, bef, mf, vf)

    return {
        "w1": jax.random.normal(ks[0], (C, C, K), jnp.float32) * 0.05,
        "w2": jax.random.normal(ks[1], (C, C, K), jnp.float32) * 0.05,
        "s1": s1, "b1": b1, "s2": s2, "b2": b2,
        "fw1": jax.random.normal(ks[2], (C, C), jnp.float32) * 0.2,
        "fb1": 0.01 * ar,
        "fs": fs, "fbb": fbb,
        "fw2": jax.random.normal(ks[3], (C, C), jnp.float32) * 0.2,
        "fb2": -0.01 * ar,
    }


def reference_forward(x, p):
    """Pure-JAX f32 reference mirroring the PyTorch module (BN in eval mode)."""
    def conv(h, w):
        return lax.conv_general_dilated(
            h, w, window_strides=(1,), padding=[(PAD, PAD)],
            dimension_numbers=("NCH", "OIH", "NCH"))

    h = conv(x, p["w1"])
    h = h * p["s1"][None, :, None] + p["b1"][None, :, None]
    h = jnp.maximum(h, 0.0)
    h = conv(h, p["w2"])
    h = h * p["s2"][None, :, None] + p["b2"][None, :, None]

    avg = jnp.mean(jnp.abs(h), axis=2)                       # (N, C)
    z = avg @ p["fw1"].T + p["fb1"]
    z = z * p["fs"] + p["fbb"]
    z = jnp.maximum(z, 0.0)
    z = z @ p["fw2"].T + p["fb2"]
    t = (avg * jax.nn.sigmoid(z))[:, :, None]
    out = h + 0.5 * (jnp.sqrt((h - t) ** 2 + 0.003)
                     - jnp.sqrt((h + t) ** 2 + 0.003))
    L2 = out.shape[2]
    return jnp.maximum(x[:, :, :L2] + out, 0.0)


if __name__ == "__main__":
    # inplanes == planes (no downsample), stride=1; C=16 keeps bf16 operands
    # sublane-tile aligned.
    N, C, L = 8, 16, 64
    key = jax.random.PRNGKey(0)
    kx, kp = jax.random.split(key)
    x = jax.random.normal(kx, (N, C, L), jnp.float32)
    params = make_params(kp, C)

    out = basic_block_1x17(x, params)       # default b_tile=4 -> grid (2,)
    out = jax.block_until_ready(out)

    ref = reference_forward(x, params)
    assert out.shape == (N, C, L - 28), out.shape
    assert bool(jnp.all(jnp.isfinite(out)))
    # bf16 MXU inputs with f32 accumulation -> slightly looser tolerance
    assert bool(jnp.allclose(out, ref, rtol=2e-2, atol=2e-2)), \
        float(jnp.max(jnp.abs(out - ref)))
    print("KERNEL_OK")
</pallas_src>

<mosaic_0001>
module attributes {stable_mosaic.version = 11 : i64} {
  func.func @kernel(%arg0: i32, %arg1: memref<1x16x264xf32, #tpu.memory_space<vmem>>, %arg2: memref<2x16x272xbf16, #tpu.memory_space<vmem>>, %arg3: memref<2x16x16xbf16, #tpu.memory_space<vmem>>, %arg4: memref<16x4xf32, #tpu.memory_space<vmem>>, %arg5: memref<144x4xbf16, #tpu.memory_space<vmem>>, %arg6: memref<1x16x144xf32, #tpu.memory_space<vmem>>) attributes {dimension_semantics = [#tpu.dimension_semantics<parallel>], iteration_bounds = array<i64: 2>, scalar_prefetch = 0 : i64, scratch_operands = 0 : i64, tpu.core_type = #tpu.core_type<tc>, window_params = [{transform_indices = @transform_0, window_bounds = array<i64: 1, 16, 264>}, {pipeline_mode = #tpu.pipeline_mode<synchronous>, transform_indices = @transform_1, window_bounds = array<i64: 2, 16, 272>}, {pipeline_mode = #tpu.pipeline_mode<synchronous>, transform_indices = @transform_2, window_bounds = array<i64: 2, 16, 16>}, {pipeline_mode = #tpu.pipeline_mode<synchronous>, transform_indices = @transform_3, window_bounds = array<i64: 16, 4>}, {pipeline_mode = #tpu.pipeline_mode<synchronous>, transform_indices = @transform_4, window_bounds = array<i64: 144, 4>}, {transform_indices = @transform_5, window_bounds = array<i64: 1, 16, 144>}]} {
    %c0 = arith.constant 0 : index
    %c0_0 = arith.constant 0 : index
    %c0_1 = arith.constant 0 : index
    %0 = vector.load %arg1[%c0, %c0_0, %c0_1] : memref<1x16x264xf32, #tpu.memory_space<vmem>>, vector<1x16x264xf32>
    %1 = vector.shape_cast %0 : vector<1x16x264xf32> to vector<16x264xf32>
    %2 = arith.truncf %1 : vector<16x264xf32> to vector<16x264xbf16>
    %3 = vector.extract_strided_slice %2 {offsets = [0, 0], sizes = [16, 200], strides = [1, 1]} : vector<16x264xbf16> to vector<16x200xbf16>
    %4 = vector.extract_strided_slice %2 {offsets = [0, 4], sizes = [16, 200], strides = [1, 1]} : vector<16x264xbf16> to vector<16x200xbf16>
    %5 = vector.extract_strided_slice %2 {offsets = [0, 8], sizes = [16, 200], strides = [1, 1]} : vector<16x264xbf16> to vector<16x200xbf16>
    %6 = vector.extract_strided_slice %2 {offsets = [0, 12], sizes = [16, 200], strides = [1, 1]} : vector<16x264xbf16> to vector<16x200xbf16>
    %7 = vector.extract_strided_slice %2 {offsets = [0, 16], sizes = [16, 200], strides = [1, 1]} : vector<16x264xbf16> to vector<16x200xbf16>
    %8 = vector.extract_strided_slice %2 {offsets = [0, 20], sizes = [16, 200], strides = [1, 1]} : vector<16x264xbf16> to vector<16x200xbf16>
    %9 = vector.extract_strided_slice %2 {offsets = [0, 24], sizes = [16, 200], strides = [1, 1]} : vector<16x264xbf16> to vector<16x200xbf16>
    %10 = vector.extract_strided_slice %2 {offsets = [0, 28], sizes = [16, 200], strides = [1, 1]} : vector<16x264xbf16> to vector<16x200xbf16>
    %11 = vector.extract_strided_slice %2 {offsets = [0, 32], sizes = [16, 200], strides = [1, 1]} : vector<16x264xbf16> to vector<16x200xbf16>
    %12 = vector.extract_strided_slice %2 {offsets = [0, 36], sizes = [16, 200], strides = [1, 1]} : vector<16x264xbf16> to vector<16x200xbf16>
    %13 = vector.extract_strided_slice %2 {offsets = [0, 40], sizes = [16, 200], strides = [1, 1]} : vector<16x264xbf16> to vector<16x200xbf16>
    %14 = vector.extract_strided_slice %2 {offsets = [0, 44], sizes = [16, 200], strides = [1, 1]} : vector<16x264xbf16> to vector<16x200xbf16>
    %15 = vector.extract_strided_slice %2 {offsets = [0, 48], sizes = [16, 200], strides = [1, 1]} : vector<16x264xbf16> to vector<16x200xbf16>
    %16 = vector.extract_strided_slice %2 {offsets = [0, 52], sizes = [16, 200], strides = [1, 1]} : vector<16x264xbf16> to vector<16x200xbf16>
    %17 = vector.extract_strided_slice %2 {offsets = [0, 56], sizes = [16, 200], strides = [1, 1]} : vector<16x264xbf16> to vector<16x200xbf16>
    %18 = vector.extract_strided_slice %2 {offsets = [0, 60], sizes = [16, 200], strides = [1, 1]} : vector<16x264xbf16> to vector<16x200xbf16>
    %19 = vector.extract_strided_slice %2 {offsets = [0, 64], sizes = [16, 200], strides = [1, 1]} : vector<16x264xbf16> to vector<16x200xbf16>
    %20 = tpu.concatenate %3, %4, %5, %6, %7, %8, %9, %10, %11, %12, %13, %14, %15, %16, %17, %18 in 0 : vector<16x200xbf16>, vector<16x200xbf16>, vector<16x200xbf16>, vector<16x200xbf16>, vector<16x200xbf16>, vector<16x200xbf16>, vector<16x200xbf16>, vector<16x200xbf16>, vector<16x200xbf16>, vector<16x200xbf16>, vector<16x200xbf16>, vector<16x200xbf16>, vector<16x200xbf16>, vector<16x200xbf16>, vector<16x200xbf16>, vector<16x200xbf16> -> vector<256x200xbf16>
    %21 = tpu.concatenate %20, %19 in 0 : vector<256x200xbf16>, vector<16x200xbf16> -> vector<272x200xbf16>
    %c0_2 = arith.constant 0 : index
    %c0_3 = arith.constant 0 : index
    %c0_4 = arith.constant 0 : index
    %22 = vector.load %arg2[%c0_2, %c0_3, %c0_4] : memref<2x16x272xbf16, #tpu.memory_space<vmem>>, vector<1x16x272xbf16>
    %23 = vector.shape_cast %22 : vector<1x16x272xbf16> to vector<16x272xbf16>
    %cst = arith.constant dense<0.000000e+00> : vector<16x200xf32>
    %24 = tpu.matmul %23, %21, %cst {dimension_numbers = #tpu.dot_dimension_numbers<[1], [0], [0], [1], [0, 0, 1, 1], [], []>} : vector<16x272xbf16>, vector<272x200xbf16>, vector<16x200xf32> -> vector<16x200xf32>
    %c0_5 = arith.constant 0 : index
    %c0_6 = arith.constant 0 : index
    %25 = vector.load %arg4[%c0_5, %c0_6] : memref<16x4xf32, #tpu.memory_space<vmem>>, vector<16x1xf32>
    %26 = vector.broadcast %25 : vector<16x1xf32> to vector<16x200xf32>
    %27 = arith.addf %24, %26 : vector<16x200xf32>
    %cst_7 = arith.constant 0.000000e+00 : f32
    %28 = vector.broadcast %cst_7 : f32 to vector<16x200xf32>
    %29 = arith.maximumf %27, %28 : vector<16x200xf32>
    %30 = arith.truncf %29 : vector<16x200xf32> to vector<16x200xbf16>
    %cst_8 = arith.constant 0.000000e+00 : bf16
    %31 = vector.broadcast %cst_8 : bf16 to vector<16x4xbf16>
    %32 = vector.extract_strided_slice %30 {offsets = [0, 0], sizes = [16, 140], strides = [1, 1]} : vector<16x200xbf16> to vector<16x140xbf16>
    %33 = tpu.concatenate %31, %32 in 1 : vector<16x4xbf16>, vector<16x140xbf16> -> vector<16x144xbf16>
    %34 = vector.extract_strided_slice %30 {offsets = [0, 0], sizes = [16, 144], strides = [1, 1]} : vector<16x200xbf16> to vector<16x144xbf16>
    %35 = vector.extract_strided_slice %30 {offsets = [0, 4], sizes = [16, 144], strides = [1, 1]} : vector<16x200xbf16> to vector<16x144xbf16>
    %36 = vector.extract_strided_slice %30 {offsets = [0, 8], sizes = [16, 144], strides = [1, 1]} : vector<16x200xbf16> to vector<16x144xbf16>
    %37 = vector.extract_strided_slice %30 {offsets = [0, 12], sizes = [16, 144], strides = [1, 1]} : vector<16x200xbf16> to vector<16x144xbf16>
    %38 = vector.extract_strided_slice %30 {offsets = [0, 16], sizes = [16, 144], strides = [1, 1]} : vector<16x200xbf16> to vector<16x144xbf16>
    %39 = vector.extract_strided_slice %30 {offsets = [0, 20], sizes = [16, 144], strides = [1, 1]} : vector<16x200xbf16> to vector<16x144xbf16>
    %40 = vector.extract_strided_slice %30 {offsets = [0, 24], sizes = [16, 144], strides = [1, 1]} : vector<16x200xbf16> to vector<16x144xbf16>
    %41 = vector.extract_strided_slice %30 {offsets = [0, 28], sizes = [16, 144], strides = [1, 1]} : vector<16x200xbf16> to vector<16x144xbf16>
    %42 = vector.extract_strided_slice %30 {offsets = [0, 32], sizes = [16, 144], strides = [1, 1]} : vector<16x200xbf16> to vector<16x144xbf16>
    %43 = vector.extract_strided_slice %30 {offsets = [0, 36], sizes = [16, 144], strides = [1, 1]} : vector<16x200xbf16> to vector<16x144xbf16>
    %44 = vector.extract_strided_slice %30 {offsets = [0, 40], sizes = [16, 144], strides = [1, 1]} : vector<16x200xbf16> to vector<16x144xbf16>
    %45 = vector.extract_strided_slice %30 {offsets = [0, 44], sizes = [16, 144], strides = [1, 1]} : vector<16x200xbf16> to vector<16x144xbf16>
    %46 = vector.extract_strided_slice %30 {offsets = [0, 48], sizes = [16, 144], strides = [1, 1]} : vector<16x200xbf16> to vector<16x144xbf16>
    %47 = vector.extract_strided_slice %30 {offsets = [0, 52], sizes = [16, 144], strides = [1, 1]} : vector<16x200xbf16> to vector<16x144xbf16>
    %48 = vector.extract_strided_slice %30 {offsets = [0, 56], sizes = [16, 144], strides = [1, 1]} : vector<16x200xbf16> to vector<16x144xbf16>
    %49 = vector.extract_strided_slice %30 {offsets = [0, 60], sizes = [16, 140], strides = [1, 1]} : vector<16x200xbf16> to vector<16x140xbf16>
    %50 = tpu.concatenate %49, %31 in 1 : vector<16x140xbf16>, vector<16x4xbf16> -> vector<16x144xbf16>
    %51 = tpu.concatenate %33, %34, %35, %36, %37, %38, %39, %40, %41, %42, %43, %44, %45, %46, %47, %48 in 0 : vector<16x144xbf16>, vector<16x144xbf16>, vector<16x144xbf16>, vector<16x144xbf16>, vector<16x144xbf16>, vector<16x144xbf16>, vector<16x144xbf16>, vector<16x144xbf16>, vector<16x144xbf16>, vector<16x144xbf16>, vector<16x144xbf16>, vector<16x144xbf16>, vector<16x144xbf16>, vector<16x144xbf16>, vector<16x144xbf16>, vector<16x144xbf16> -> vector<256x144xbf16>
    %52 = tpu.concatenate %51, %50 in 0 : vector<256x144xbf16>, vector<16x144xbf16> -> vector<272x144xbf16>
    %c1 = arith.constant 1 : index
    %c0_9 = arith.constant 0 : index
    %c0_10 = arith.constant 0 : index
    %53 = vector.load %arg2[%c1, %c0_9, %c0_10] : memref<2x16x272xbf16, #tpu.memory_space<vmem>>, vector<1x16x272xbf16>
    %54 = vector.shape_cast %53 : vector<1x16x272xbf16> to vector<16x272xbf16>
    %cst_11 = arith.constant dense<0.000000e+00> : vector<16x144xf32>
    %55 = tpu.matmul %54, %52, %cst_11 {dimension_numbers = #tpu.dot_dimension_numbers<[1], [0], [0], [1], [0, 0, 1, 1], [], []>} : vector<16x272xbf16>, vector<272x144xbf16>, vector<16x144xf32> -> vector<16x144xf32>
    %c0_12 = arith.constant 0 : index
    %c1_13 = arith.constant 1 : index
    %56 = vector.load %arg4[%c0_12, %c1_13] : memref<16x4xf32, #tpu.memory_space<vmem>>, vector<16x1xf32>
    %57 = vector.broadcast %56 : vector<16x1xf32> to vector<16x144xf32>
    %58 = arith.addf %55, %57 : vector<16x144xf32>
    %59 = math.absf %58 : vector<16x144xf32>
    %60 = arith.truncf %59 : vector<16x144xf32> to vector<16x144xbf16>
    %c0_14 = arith.constant 0 : index
    %c0_15 = arith.constant 0 : index
    %61 = vector.load %arg5[%c0_14, %c0_15] : memref<144x4xbf16, #tpu.memory_space<vmem>>, vector<144x4xbf16>
    %cst_16 = arith.constant dense<0.000000e+00> : vector<16x4xf32>
    %62 = tpu.matmul %60, %61, %cst_16 {dimension_numbers = #tpu.dot_dimension_numbers<[1], [0], [0], [1], [0, 0, 1, 1], [], []>} : vector<16x144xbf16>, vector<144x4xbf16>, vector<16x4xf32> -> vector<16x4xf32>
    %cst_17 = arith.constant 0.027777778 : f32
    %63 = vector.broadcast %cst_17 : f32 to vector<16x4xf32>
    %64 = arith.mulf %62, %63 : vector<16x4xf32>
    %c0_18 = arith.constant 0 : index
    %c0_19 = arith.constant 0 : index
    %c0_20 = arith.constant 0 : index
    %65 = vector.load %arg3[%c0_18, %c0_19, %c0_20] : memref<2x16x16xbf16, #tpu.memory_space<vmem>>, vector<1x16x16xbf16>
    %66 = vector.shape_cast %65 : vector<1x16x16xbf16> to vector<16x16xbf16>
    %67 = arith.truncf %64 : vector<16x4xf32> to vector<16x4xbf16>
    %cst_21 = arith.constant dense<0.000000e+00> : vector<16x4xf32>
    %68 = tpu.matmul %66, %67, %cst_21 {dimension_numbers = #tpu.dot_dimension_numbers<[1], [0], [0], [1], [0, 0, 1, 1], [], []>} : vector<16x16xbf16>, vector<16x4xbf16>, vector<16x4xf32> -> vector<16x4xf32>
    %c0_22 = arith.constant 0 : index
    %c2 = arith.constant 2 : index
    %69 = vector.load %arg4[%c0_22, %c2] : memref<16x4xf32, #tpu.memory_space<vmem>>, vector<16x1xf32>
    %70 = vector.broadcast %69 : vector<16x1xf32> to vector<16x4xf32>
    %71 = arith.addf %68, %70 : vector<16x4xf32>
    %cst_23 = arith.constant 0.000000e+00 : f32
    %72 = vector.broadcast %cst_23 : f32 to vector<16x4xf32>
    %73 = arith.maximumf %71, %72 : vector<16x4xf32>
    %c1_24 = arith.constant 1 : index
    %c0_25 = arith.constant 0 : index
    %c0_26 = arith.constant 0 : index
    %74 = vector.load %arg3[%c1_24, %c0_25, %c0_26] : memref<2x16x16xbf16, #tpu.memory_space<vmem>>, vector<1x16x16xbf16>
    %75 = vector.shape_cast %74 : vector<1x16x16xbf16> to vector<16x16xbf16>
    %76 = arith.truncf %73 : vector<16x4xf32> to vector<16x4xbf16>
    %cst_27 = arith.constant dense<0.000000e+00> : vector<16x4xf32>
    %77 = tpu.matmul %75, %76, %cst_27 {dimension_numbers = #tpu.dot_dimension_numbers<[1], [0], [0], [1], [0, 0, 1, 1], [], []>} : vector<16x16xbf16>, vector<16x4xbf16>, vector<16x4xf32> -> vector<16x4xf32>
    %c0_28 = arith.constant 0 : index
    %c3 = arith.constant 3 : index
    %78 = vector.load %arg4[%c0_28, %c3] : memref<16x4xf32, #tpu.memory_space<vmem>>, vector<16x1xf32>
    %79 = vector.broadcast %78 : vector<16x1xf32> to vector<16x4xf32>
    %80 = arith.addf %77, %79 : vector<16x4xf32>
    %81 = arith.negf %80 : vector<16x4xf32>
    %82 = math.exp %81 : vector<16x4xf32>
    %cst_29 = arith.constant 1.000000e+00 : f32
    %83 = vector.broadcast %cst_29 : f32 to vector<16x4xf32>
    %84 = arith.addf %83, %82 : vector<16x4xf32>
    %85 = arith.divf %83, %84 : vector<16x4xf32>
    %86 = arith.mulf %64, %85 : vector<16x4xf32>
    %87 = tpu.concatenate %86, %86 in 1 : vector<16x4xf32>, vector<16x4xf32> -> vector<16x8xf32>
    %88 = tpu.concatenate %87, %87 in 1 : vector<16x8xf32>, vector<16x8xf32> -> vector<16x16xf32>
    %89 = tpu.concatenate %88, %88 in 1 : vector<16x16xf32>, vector<16x16xf32> -> vector<16x32xf32>
    %90 = tpu.concatenate %89, %89 in 1 : vector<16x32xf32>, vector<16x32xf32> -> vector<16x64xf32>
    %91 = tpu.concatenate %90, %90 in 1 : vector<16x64xf32>, vector<16x64xf32> -> vector<16x128xf32>
    %92 = tpu.concatenate %91, %91 in 1 : vector<16x128xf32>, vector<16x128xf32> -> vector<16x256xf32>
    %93 = vector.extract_strided_slice %92 {offsets = [0, 0], sizes = [16, 144], strides = [1, 1]} : vector<16x256xf32> to vector<16x144xf32>
    %94 = arith.subf %58, %93 : vector<16x144xf32>
    %95 = arith.mulf %94, %94 : vector<16x144xf32>
    %cst_30 = arith.constant 3.000000e-03 : f32
    %96 = vector.broadcast %cst_30 : f32 to vector<16x144xf32>
    %97 = arith.addf %95, %96 : vector<16x144xf32>
    %98 = math.sqrt %97 : vector<16x144xf32>
    %99 = arith.addf %58, %93 : vector<16x144xf32>
    %100 = arith.mulf %99, %99 : vector<16x144xf32>
    %cst_31 = arith.constant 3.000000e-03 : f32
    %101 = vector.broadcast %cst_31 : f32 to vector<16x144xf32>
    %102 = arith.addf %100, %101 : vector<16x144xf32>
    %103 = math.sqrt %102 : vector<16x144xf32>
    %104 = arith.subf %98, %103 : vector<16x144xf32>
    %cst_32 = arith.constant 5.000000e-01 : f32
    %105 = vector.broadcast %cst_32 : f32 to vector<16x144xf32>
    %106 = arith.mulf %105, %104 : vector<16x144xf32>
    %107 = arith.addf %58, %106 : vector<16x144xf32>
    %108 = vector.extract_strided_slice %1 {offsets = [0, 4], sizes = [16, 144], strides = [1, 1]} : vector<16x264xf32> to vector<16x144xf32>
    %109 = arith.addf %108, %107 : vector<16x144xf32>
    %cst_33 = arith.constant 0.000000e+00 : f32
    %110 = vector.broadcast %cst_33 : f32 to vector<16x144xf32>
    %111 = arith.maximumf %109, %110 : vector<16x144xf32>
    %c0_34 = arith.constant 0 : index
    %c0_35 = arith.constant 0 : index
    %c0_36 = arith.constant 0 : index
    %112 = vector.load %arg6[%c0_34, %c0_35, %c0_36] : memref<1x16x144xf32, #tpu.memory_space<vmem>>, vector<1x16x144xf32>
    %113 = vector.shape_cast %112 : vector<1x16x144xf32> to vector<16x144xf32>
    %114 = vector.shape_cast %111 : vector<16x144xf32> to vector<1x16x144xf32>
    tpu.vector_store %arg6[%c0_34, %c0_35, %c0_36], %114 {strides = array<i32>} : memref<1x16x144xf32, #tpu.memory_space<vmem>>, vector<1x16x144xf32>,
    return
  }
  func.func @transform_0(%arg0: i32) -> (i32, i32, i32) {
    %c0_i32 = arith.constant 0 : i32
    %c0_i32_0 = arith.constant 0 : i32
    %c0_i32_1 = arith.constant 0 : i32
    return %arg0, %c0_i32, %c0_i32_0 : i32, i32, i32
  }
  func.func @transform_1(%arg0: i32) -> (i32, i32, i32) {
    %c0_i32 = arith.constant 0 : i32
    %c0_i32_0 = arith.constant 0 : i32
    %c0_i32_1 = arith.constant 0 : i32
    %c0_i32_2 = arith.constant 0 : i32
    return %c0_i32, %c0_i32_0, %c0_i32_1 : i32, i32, i32
  }
  func.func @transform_2(%arg0: i32) -> (i32, i32, i32) {
    %c0_i32 = arith.constant 0 : i32
    %c0_i32_0 = arith.constant 0 : i32
    %c0_i32_1 = arith.constant 0 : i32
    %c0_i32_2 = arith.constant 0 : i32
    return %c0_i32, %c0_i32_0, %c0_i32_1 : i32, i32, i32
  }
  func.func @transform_3(%arg0: i32) -> (i32, i32) {
    %c0_i32 = arith.constant 0 : i32
    %c0_i32_0 = arith.constant 0 : i32
    %c0_i32_1 = arith.constant 0 : i32
    return %c0_i32, %c0_i32_0 : i32, i32
  }
  func.func @transform_4(%arg0: i32) -> (i32, i32) {
    %c0_i32 = arith.constant 0 : i32
    %c0_i32_0 = arith.constant 0 : i32
    %c0_i32_1 = arith.constant 0 : i32
    return %c0_i32, %c0_i32_0 : i32, i32
  }
  func.func @transform_5(%arg0: i32) -> (i32, i32, i32) {
    %c0_i32 = arith.constant 0 : i32
    %c0_i32_0 = arith.constant 0 : i32
    %c0_i32_1 = arith.constant 0 : i32
    return %arg0, %c0_i32, %c0_i32_0 : i32, i32, i32
  }
}

</mosaic_0001>

<llo_original>
// kernel: tpu_custom_call.1
$region0: #{tpu_custom_call.1}
  #allocation0 [shape = 'u32[]', space=smem, size = 0x4, offset = 0x4, fixed_abs, tag = 'smem constant byte address 0x4 - core index']
  #allocation1 [shape = 'u32[144,128]{1,0:T(1,128)}', space=vmem, size = 0x12000, scoped, tag = 'internal scratch']
  %s0 = inlined_call_operand.vmem [shape: f32[2,16,264], index: 0, kind: input, shape index: {}]
  %s1 = inlined_call_operand.hbm [shape: bf16[2,16,272], index: 1, kind: input, shape index: {}]
  %s2 = inlined_call_operand.hbm [shape: bf16[2,16,16], index: 2, kind: input, shape index: {}]
  %s3 = inlined_call_operand.vmem [shape: f32[16,4], index: 3, kind: input, shape index: {}]
  %s4 = inlined_call_operand.vmem [shape: bf16[144,4], index: 4, kind: input, shape index: {}]
  %s5 = inlined_call_operand.hbm [shape: f32[2,16,144], index: 5, kind: output, shape index: {}]
  %s6 = sld [smem:[#allocation0]]
  $region61: #{tpu_custom_call.1} parent=0
    _
  %s8 = ssub.s32 1, %s6
  %s9 = scalar_select 0, %s8, %s6
  $region1: #{tpu_custom_call.1} parent=0
    #allocation2 [shape = 'u8[24576]{0}', space=vmem, size = 0x6000, scoped, tag = 'input window, operand 1, single buffered']
    #allocation3 [shape = 's32[2]{0}', space=sflag, size = 0x8, scoped, tag = 'scoped memory for tpu_custom_call.1']
    #allocation4 [shape = 's32[2]{0}', space=sflag, size = 0x8, scoped, tag = 'scoped memory for tpu_custom_call.1']
    #allocation5 [shape = 'u8[8192]{0}', space=vmem, size = 0x2000, scoped, tag = 'input window, operand 2, single buffered']
    #allocation6 [shape = 's32[1]{0}', space=sflag, size = 0x4, scoped, tag = 'scoped memory for tpu_custom_call.1']
    #allocation7 [shape = 'u8[32768]{0}', space=vmem, size = 0x8000, scoped, tag = 'output window, operand 0']
    %10 = vsyncpa [#allocation3], 0
    %11 = vsyncpa [#allocation6], 0
    %12 = vsyncpa [#allocation4], 0
    %s13 = scalar_lea.sflag [#allocation4], 1
    %14 = vsyncpa %s13, 0
    loop: start=0, step=1, limit=4
    $region2: #{tpu_custom_call.1} parent=1 // loop_pre_header
      _
    $region3: #{tpu_custom_call.1} parent=1 // loop_header
      %s16 = sphi 0, %s20
      %p17 = scmp.ge.s32.totalorder %s16, 4
      %s26 = sphi 0, %s28
      %s29 = sphi 0, %s26
      %s30 = sphi 0, %s29
      %s46 = sphi 0, %s30
      %s50 = sphi 0, %s50
      %s52 = sphi 0, %s50
      %s53 = sphi 0, %s52
      %s67 = sphi 0, %s53
      %s71 = sphi 0, %s71
      %s73 = sphi 0, %s71
      %s74 = sphi 0, %s73
      %s88 = sphi 0, %s74
      %s92 = sphi 0, %s92
      %s94 = sphi 0, %s92
      %s95 = sphi 0, %s94
      %s109 = sphi 0, %s95
      %s113 = sphi 0, %s113
      %s115 = sphi 0, %s113
      %s116 = sphi 0, %s115
      %s130 = sphi 0, %s116
      %s136 = sphi 0, %s138
      %s139 = sphi 0, %s136
      %s140 = sphi 0, %s139
      %s156 = sphi 0, %s140
    $region4: #{tpu_custom_call.1} parent=1 // loop_header_branch
      %19 = sbr.rel (%p17) target = $region8
    $region5: #{tpu_custom_call.1} parent=1 // loop_body
      %s21 = ssub.s32 %s16, 1
      %s22 = ssub.s32 %s16, 2
      %s23 = sadd.s32 %s16, 1
      %s24 = ssub.s32 %s16, %s23
      %p25 = scmp.eq.s32.totalorder %s24, 0
      %s27 = sadd.s32 %s26, 1
      %s28 = scalar_select %p25, %s26, %s27
      %p31 = pneg %p25
      %p32 = scmp.eq.s32.totalorder %s16, 1
      %p33 = por %p31, %p32
      %p34 = scmp.ne.s32.totalorder %s26, %s29
      %p35 = scmp.eq.s32.totalorder %s16, 0
      %p36 = por %p34, %p35
      %p37 = scmp.ne.s32.totalorder %s26, %s29
      %p38 = scmp.eq.s32.totalorder %s21, 1
      %p39 = por %p37, %p38
      %p40 = scmp.ne.s32.totalorder %s29, %s30
      %p41 = scmp.eq.s32.totalorder %s21, 0
      %p42 = por %p40, %p41
      %p43 = scmp.ne.s32.totalorder %s29, %s30
      %p44 = scmp.eq.s32.totalorder %s22, 1
      %p45 = por %p43, %p44
      %p47 = scmp.ne.s32.totalorder %s30, %s46
      %p48 = scmp.eq.s32.totalorder %s22, 0
      %p49 = por %p47, %p48
      %s51 = sadd.s32 %s50, 1
      %p54 = scmp.eq.s32.totalorder %s16, 1
      %p55 = scmp.ne.s32.totalorder %s50, %s52
      %p56 = scmp.eq.s32.totalorder %s16, 0
      %p57 = por %p55, %p56
      %p58 = scmp.ne.s32.totalorder %s50, %s52
      %p59 = scmp.eq.s32.totalorder %s21, 1
      %p60 = por %p58, %p59
      %p61 = scmp.ne.s32.totalorder %s52, %s53
      %p62 = scmp.eq.s32.totalorder %s21, 0
      %p63 = por %p61, %p62
      %p64 = scmp.ne.s32.totalorder %s52, %s53
      %p65 = scmp.eq.s32.totalorder %s22, 1
      %p66 = por %p64, %p65
      %p68 = scmp.ne.s32.totalorder %s53, %s67
      %p69 = scmp.eq.s32.totalorder %s22, 0
      %p70 = por %p68, %p69
      %s72 = sadd.s32 %s71, 1
      %p75 = scmp.eq.s32.totalorder %s16, 1
      %p76 = scmp.ne.s32.totalorder %s71, %s73
      %p77 = scmp.eq.s32.totalorder %s16, 0
      %p78 = por %p76, %p77
      %p79 = scmp.ne.s32.totalorder %s71, %s73
      %p80 = scmp.eq.s32.totalorder %s21, 1
      %p81 = por %p79, %p80
      %p82 = scmp.ne.s32.totalorder %s73, %s74
      %p83 = scmp.eq.s32.totalorder %s21, 0
      %p84 = por %p82, %p83
      %p85 = scmp.ne.s32.totalorder %s73, %s74
      %p86 = scmp.eq.s32.totalorder %s22, 1
      %p87 = por %p85, %p86
      %p89 = scmp.ne.s32.totalorder %s74, %s88
      %p90 = scmp.eq.s32.totalorder %s22, 0
      %p91 = por %p89, %p90
      %s93 = sadd.s32 %s92, 1
      %p96 = scmp.eq.s32.totalorder %s16, 1
      %p97 = scmp.ne.s32.totalorder %s92, %s94
      %p98 = scmp.eq.s32.totalorder %s16, 0
      %p99 = por %p97, %p98
      %p100 = scmp.ne.s32.totalorder %s92, %s94
      %p101 = scmp.eq.s32.totalorder %s21, 1
      %p102 = por %p100, %p101
      %p103 = scmp.ne.s32.totalorder %s94, %s95
      %p104 = scmp.eq.s32.totalorder %s21, 0
      %p105 = por %p103, %p104
      %p106 = scmp.ne.s32.totalorder %s94, %s95
      %p107 = scmp.eq.s32.totalorder %s22, 1
      %p108 = por %p106, %p107
      %p110 = scmp.ne.s32.totalorder %s95, %s109
      %p111 = scmp.eq.s32.totalorder %s22, 0
      %p112 = por %p110, %p111
      %s114 = sadd.s32 %s113, 1
      %p117 = scmp.eq.s32.totalorder %s16, 1
      %p118 = scmp.ne.s32.totalorder %s113, %s115
      %p119 = scmp.eq.s32.totalorder %s16, 0
      %p120 = por %p118, %p119
      %p121 = scmp.ne.s32.totalorder %s113, %s115
      %p122 = scmp.eq.s32.totalorder %s21, 1
      %p123 = por %p121, %p122
      %p124 = scmp.ne.s32.totalorder %s115, %s116
      %p125 = scmp.eq.s32.totalorder %s21, 0
      %p126 = por %p124, %p125
      %p127 = scmp.ne.s32.totalorder %s115, %s116
      %p128 = scmp.eq.s32.totalorder %s22, 1
      %p129 = por %p127, %p128
      %p131 = scmp.ne.s32.totalorder %s116, %s130
      %p132 = scmp.eq.s32.totalorder %s22, 0
      %p133 = por %p131, %p132
      %s134 = ssub.s32 %s16, %s23
      %p135 = scmp.eq.s32.totalorder %s134, 0
      %s137 = sadd.s32 %s136, 1
      %s138 = scalar_select %p135, %s136, %s137
      %p141 = pneg %p135
      %p142 = scmp.eq.s32.totalorder %s16, 1
      %p143 = por %p141, %p142
      %p144 = scmp.ne.s32.totalorder %s136, %s139
      %p145 = scmp.eq.s32.totalorder %s16, 0
      %p146 = por %p144, %p145
      %p147 = scmp.ne.s32.totalorder %s136, %s139
      %p148 = scmp.eq.s32.totalorder %s21, 1
      %p149 = por %p147, %p148
      %p150 = scmp.ne.s32.totalorder %s139, %s140
      %p151 = scmp.eq.s32.totalorder %s21, 0
      %p152 = por %p150, %p151
      %p153 = scmp.ne.s32.totalorder %s139, %s140
      %p154 = scmp.eq.s32.totalorder %s22, 1
      %p155 = por %p153, %p154
      %p157 = scmp.ne.s32.totalorder %s140, %s156
      %p158 = scmp.eq.s32.totalorder %s22, 0
      %p159 = por %p157, %p158
      %p160 = scmp.le.s32.totalorder 1, %s16
      %p161 = scmp.lt.s32.totalorder %s16, 3
      %p162 = pnand %p160, %p161
      %p163 = pneg %p162
      // Predicated region
      $region9: #{tpu_custom_call.1} parent=5 // pred_check
        _
      $region10: #{tpu_custom_call.1} parent=5 // pred_check_branch
        %165 = sbr.rel (%p162) target = $region12
      $region11: #{tpu_custom_call.1} parent=5 // pred_region
        %s166 = ssub.s32 %s16, 1
        // Predicated region
        $region13: #{tpu_custom_call.1} parent=11 // pred_check
          %p167 = pneg %p63
        $region14: #{tpu_custom_call.1} parent=11 // pred_check_branch
          %169 = sbr.rel (%p167) target = $region16
        $region15: #{tpu_custom_call.1} parent=11 // pred_region
          %s171 = ssub.s32 768, 768
          %172 = vsyncadd [#allocation3], %s171
          %s173 = sshll.u32 [#allocation2], 4
          %s174 = int_to_ptr.vmem [resolvable:$true] %s173
          %179 = dma.hbm_to_vmem [thread:$0]  %s1, 768, %s174, [#allocation3], 192, 192, 12
        $region16: #{tpu_custom_call.1} parent=11 // pred_fallthru
          _
        // Predicated region
        $region17: #{tpu_custom_call.1} parent=11 // pred_check
          %p180 = pneg %p84
        $region18: #{tpu_custom_call.1} parent=11 // pred_check_branch
          %182 = sbr.rel (%p180) target = $region20
        $region19: #{tpu_custom_call.1} parent=11 // pred_region
          %s184 = ssub.s32 256, 256
          %185 = vsyncadd [#allocation6], %s184
          %s186 = sshll.u32 [#allocation5], 4
          %s187 = int_to_ptr.vmem [resolvable:$true] %s186
          %192 = dma.hbm_to_vmem [thread:$0]  %s2, 256, %s187, [#allocation6], 64, 64, 4
        $region20: #{tpu_custom_call.1} parent=11 // pred_fallthru
          _
        // Predicated region
        $region21: #{tpu_custom_call.1} parent=11 // pred_check
          %p193 = pneg %p105
        $region22: #{tpu_custom_call.1} parent=11 // pred_check_branch
          %195 = sbr.rel (%p193) target = $region24
        $region23: #{tpu_custom_call.1} parent=11 // pred_region
          _
        $region24: #{tpu_custom_call.1} parent=11 // pred_fallthru
          _
        // Predicated region
        $region25: #{tpu_custom_call.1} parent=11 // pred_check
          %p196 = pneg %p126
        $region26: #{tpu_custom_call.1} parent=11 // pred_check_branch
          %198 = sbr.rel (%p196) target = $region28
        $region27: #{tpu_custom_call.1} parent=11 // pred_region
          _
        $region28: #{tpu_custom_call.1} parent=11 // pred_fallthru
          _
      $region12: #{tpu_custom_call.1} parent=5 // pred_fallthru
        _
      %p199 = scmp.lt.s32.totalorder %s16, 2
      // Predicated region
      $region29: #{tpu_custom_call.1} parent=5 // pred_check
        %p200 = pneg %p199
      $region30: #{tpu_custom_call.1} parent=5 // pred_check_branch
        %202 = sbr.rel (%p200) target = $region32
      $region31: #{tpu_custom_call.1} parent=5 // pred_region
        // Predicated region
        $region33: #{tpu_custom_call.1} parent=31 // pred_check
          %p203 = pneg %p36
        $region34: #{tpu_custom_call.1} parent=31 // pred_check_branch
          %205 = sbr.rel (%p203) target = $region36
        $region35: #{tpu_custom_call.1} parent=31 // pred_region
          %p206 = scmp.lt.s32.totalorder %s16, 1
          %s207 = scalar_select %p206, %s16, 1
          %s208 = smul.addr %s207, 6
          %s209 = smul.addr %s208, 8
          %s210 = scalar_lea.vmem %s0, %s209
        $region36: #{tpu_custom_call.1} parent=31 // pred_fallthru
          _
      $region32: #{tpu_custom_call.1} parent=5 // pred_fallthru
        _
      %p211 = scmp.le.s32.totalorder 1, %s16
      %p212 = scmp.lt.s32.totalorder %s16, 3
      %p213 = pnand %p211, %p212
      %p214 = pneg %p213
      // Predicated region
      $region37: #{tpu_custom_call.1} parent=5 // pred_check
        _
      $region38: #{tpu_custom_call.1} parent=5 // pred_check_branch
        %216 = sbr.rel (%p213) target = $region40
      $region39: #{tpu_custom_call.1} parent=5 // pred_region
        %s217 = ssub.s32 %s16, 1
        // Predicated region
        $region41: #{tpu_custom_call.1} parent=39 // pred_check
          %p218 = pneg %p63
        $region42: #{tpu_custom_call.1} parent=39 // pred_check_branch
          %220 = sbr.rel (%p218) target = $region44
        $region43: #{tpu_custom_call.1} parent=39 // pred_region
          %221 = dma.done [#allocation3], 768
        $region44: #{tpu_custom_call.1} parent=39 // pred_fallthru
          _
        // Predicated region
        $region45: #{tpu_custom_call.1} parent=39 // pred_check
          %p222 = pneg %p84
        $region46: #{tpu_custom_call.1} parent=39 // pred_check_branch
          %224 = sbr.rel (%p222) target = $region48
        $region47: #{tpu_custom_call.1} parent=39 // pred_region
          %225 = dma.done [#allocation6], 256
        $region48: #{tpu_custom_call.1} parent=39 // pred_fallthru
          _
        %p226 = scmp.lt.s32.totalorder %s21, 1
        %s227 = scalar_select %p226, %s21, 1
        %s228 = smul.addr %s227, 6
        %s229 = smul.addr %s228, 8
        %s230 = scalar_lea.vmem %s0, %s229
        %p231 = pneg %p42
        %p232 = pneg %p39
        %p233 = pneg %p63
        %p234 = pneg %p60
        %p235 = pneg %p84
        %p236 = pneg %p81
        %p237 = pneg %p105
        %p238 = pneg %p102
        %p239 = pneg %p126
        %p240 = pneg %p123
        %p241 = pneg %p152
        %p242 = pneg %p149
        %s243 = sand.u32 %s139, 1
        %s244 = scalar_lea.sflag [#allocation4], %s243
        %s245 = sand.u32 %s139, 1
        %s246 = smul.addr %s245, 32
        %s247 = scalar_lea.vmem [#allocation7], %s246
        %p248 = scmp.lt.s32.totalorder %s21, 1
        %s249 = scalar_select %p248, %s21, 1
        %s250 = smul.addr %s249, 6
        %s251 = smul.addr %s250, 8
        %s252 = scalar_lea.vmem %s0, %s251
        %v254 = vld [vmem:[%s252] sm:$0xff]
        %v255 = vld [vmem:[%s252 + $0x8] sm:$0xff]
        %v256 = vld [vmem:[%s252 + $0x10] sm:$0xff]
        %v257 = vld [vmem:[%s252 + $0x18] sm:$0xff]
        %v258 = vld [vmem:[%s252 + $0x20] sm:$0xff]
        %v259 = vld [vmem:[%s252 + $0x28] sm:$0xff]
        %v260 = vpack.c.bf16 %v257, %v254
        %v261 = vpack.c.bf16 %v258, %v255
        %v262 = vpack.c.bf16 %v259, %v256
        %265 = vrot.lane.b32.xlu0 %v260, 124
        %v266 = vpop.permute.xlu0 %265
        %267 = vrot.lane.b32.xlu0 %v261, 124
        %v268 = vpop.permute.xlu0 %267
        %vm269 = vcmask 1014784
        %v270 = vsel %vm269, %v266, %v268
        %273 = vrot.lane.b32.xlu0 %v260, 120
        %v274 = vpop.permute.xlu0 %273
        %275 = vrot.lane.b32.xlu0 %v261, 120
        %v276 = vpop.permute.xlu0 %275
        %vm277 = vcmask 982016
        %v278 = vsel %vm277, %v274, %v276
        %281 = vrot.lane.b32.xlu0 %v260, 116
        %v282 = vpop.permute.xlu0 %281
        %283 = vrot.lane.b32.xlu0 %v261, 116
        %v284 = vpop.permute.xlu0 %283
        %vm285 = vcmask 949248
        %v286 = vsel %vm285, %v282, %v284
        %289 = vrot.lane.b32.xlu0 %v260, 112
        %v290 = vpop.permute.xlu0 %289
        %291 = vrot.lane.b32.xlu0 %v261, 112
        %v292 = vpop.permute.xlu0 %291
        %vm293 = vcmask 916480
        %v294 = vsel %vm293, %v290, %v292
        %297 = vrot.lane.b32.xlu0 %v260, 108
        %v298 = vpop.permute.xlu0 %297
        %299 = vrot.lane.b32.xlu0 %v261, 108
        %v300 = vpop.permute.xlu0 %299
        %vm301 = vcmask 883712
        %v302 = vsel %vm301, %v298, %v300
        %305 = vrot.lane.b32.xlu0 %v260, 104
        %v306 = vpop.permute.xlu0 %305
        %307 = vrot.lane.b32.xlu0 %v261, 104
        %v308 = vpop.permute.xlu0 %307
        %vm309 = vcmask 850944
        %v310 = vsel %vm309, %v306, %v308
        %313 = vrot.lane.b32.xlu0 %v260, 100
        %v314 = vpop.permute.xlu0 %313
        %315 = vrot.lane.b32.xlu0 %v261, 100
        %v316 = vpop.permute.xlu0 %315
        %vm317 = vcmask 818176
        %v318 = vsel %vm317, %v314, %v316
        %321 = vrot.lane.b32.xlu0 %v260, 96
        %v322 = vpop.permute.xlu0 %321
        %323 = vrot.lane.b32.xlu0 %v261, 96
        %v324 = vpop.permute.xlu0 %323
        %vm325 = vcmask 785408
        %v326 = vsel %vm325, %v322, %v324
        %329 = vrot.lane.b32.xlu0 %v260, 92
        %v330 = vpop.permute.xlu0 %329
        %331 = vrot.lane.b32.xlu0 %v261, 92
        %v332 = vpop.permute.xlu0 %331
        %vm333 = vcmask 752640
        %v334 = vsel %vm333, %v330, %v332
        %337 = vrot.lane.b32.xlu0 %v260, 88
        %v338 = vpop.permute.xlu0 %337
        %339 = vrot.lane.b32.xlu0 %v261, 88
        %v340 = vpop.permute.xlu0 %339
        %vm341 = vcmask 719872
        %v342 = vsel %vm341, %v338, %v340
        %345 = vrot.lane.b32.xlu0 %v260, 84
        %v346 = vpop.permute.xlu0 %345
        %347 = vrot.lane.b32.xlu0 %v261, 84
        %v348 = vpop.permute.xlu0 %347
        %vm349 = vcmask 687104
        %v350 = vsel %vm349, %v346, %v348
        %353 = vrot.lane.b32.xlu0 %v260, 80
        %v354 = vpop.permute.xlu0 %353
        %355 = vrot.lane.b32.xlu0 %v261, 80
        %v356 = vpop.permute.xlu0 %355
        %vm357 = vcmask 654336
        %v358 = vsel %vm357, %v354, %v356
        %361 = vrot.lane.b32.xlu0 %v260, 76
        %v362 = vpop.permute.xlu0 %361
        %363 = vrot.lane.b32.xlu0 %v261, 76
        %v364 = vpop.permute.xlu0 %363
        %vm365 = vcmask 621568
        %v366 = vsel %vm365, %v362, %v364
        %369 = vrot.lane.b32.xlu0 %v260, 72
        %v370 = vpop.permute.xlu0 %369
        %371 = vrot.lane.b32.xlu0 %v261, 72
        %v372 = vpop.permute.xlu0 %371
        %vm373 = vcmask 588800
        %v374 = vsel %vm373, %v370, %v372
        %378 = vrot.lane.b32.xlu0 %v260, 68
        %v379 = vpop.permute.xlu0 %378
        %380 = vrot.lane.b32.xlu0 %v261, 68
        %v381 = vpop.permute.xlu0 %380
        %382 = vrot.lane.b32.xlu0 %v262, 68
        %v383 = vpop.permute.xlu0 %382
        %vm384 = vcmask 556032
        %v385 = vsel %vm384, %v379, %v381
        %v386 = vsel %vm384, %v381, %v383
        %389 = vrot.lane.b32.xlu0 %v260, 64
        %v390 = vpop.permute.xlu0 %389
        %391 = vrot.lane.b32.xlu0 %v261, 64
        %v392 = vpop.permute.xlu0 %391
        %393 = vrot.lane.b32.xlu0 %v262, 64
        %v394 = vpop.permute.xlu0 %393
        %vm395 = vcmask 523264
        %v396 = vsel %vm395, %v390, %v392
        %v397 = vsel %vm395, %v392, %v394
        %v400 = vld [vmem:[#allocation2] sm:$0xff]
        %v401 = vld [vmem:[#allocation2 + $0x8] sm:$0xf]
        %v402 = vld [vmem:[#allocation2 + $0xc] sm:$0xff]
        %v403 = vld [vmem:[#allocation2 + $0x14] sm:$0xf]
        %v404 = vld [vmem:[%s3] sm:$0xff]
        %v405 = vld [vmem:[%s3 + $0x8] sm:$0xff]
        %407 = vset.pattern.permute.xlu0 0
        %408 = vperm.xlu0 %407, %v404
        %v409 = vpop.permute.xlu0 %408
        %412 = vset.pattern.permute.xlu0 0
        %413 = vperm.xlu0 %412, %v405
        %v414 = vpop.permute.xlu0 %413
        %v420 = vunpack.c.l.b16 %v400
        %v421 = vunpack.c.h.b16 %v400
        %v422 = vunpack.c.l.b16 %v401
        %v423 = vunpack.c.l.b16 %v402
        %v424 = vunpack.c.h.b16 %v402
        %v425 = vunpack.c.l.b16 %v403
        %v426 = vpack.c.b16 %v423, %v420
        %v427 = vpack.c.b16 %v424, %v421
        %v428 = vpack.c.b16 %v425, %v422
        %vm431 = vcmask 130048
        %v433 = vsel %vm431, %v428, 0
        %435 = vmatprep.subr.bf16.mxu0 %v261
        %436 = vmatpush1.bf16.msra.mxu0 %v260
        %437 = vmatprep.subr.bf16.mxu0 %v268
        %438 = vmatpush1.bf16.msra.mxu0 %v270
        %439 = vmatprep.subr.bf16.mxu0 %v276
        %440 = vmatpush1.bf16.msra.mxu0 %v278
        %441 = vmatprep.subr.bf16.mxu0 %v284
        %442 = vmatpush1.bf16.msra.mxu0 %v286
        %443 = vmatprep.subr.bf16.mxu0 %v292
        %444 = vmatpush1.bf16.msra.mxu0 %v294
        %445 = vmatprep.subr.bf16.mxu0 %v300
        %446 = vmatpush1.bf16.msra.mxu0 %v302
        %447 = vmatprep.subr.bf16.mxu0 %v308
        %448 = vmatpush1.bf16.msra.mxu0 %v310
        %449 = vmatprep.subr.bf16.mxu0 %v316
        %450 = vmatpush1.bf16.msra.mxu0 %v318
        %451 = vmatprep.subr.bf16.mxu0 %v324
        %452 = vmatpush1.bf16.msra.mxu0 %v326
        %453 = vmatprep.subr.bf16.mxu0 %v332
        %454 = vmatpush1.bf16.msra.mxu0 %v334
        %455 = vmatprep.subr.bf16.mxu0 %v340
        %456 = vmatpush1.bf16.msra.mxu0 %v342
        %457 = vmatprep.subr.bf16.mxu0 %v348
        %458 = vmatpush1.bf16.msra.mxu0 %v350
        %459 = vmatprep.subr.bf16.mxu0 %v356
        %460 = vmatpush1.bf16.msra.mxu0 %v358
        %461 = vmatprep.subr.bf16.mxu0 %v364
        %462 = vmatpush1.bf16.msra.mxu0 %v366
        %463 = vmatprep.subr.bf16.mxu0 %v372
        %464 = vmatpush1.bf16.msra.mxu0 %v374
        %465 = vmatprep.subr.bf16.mxu0 %v386
        %466 = vmatpush1.bf16.msra.mxu0 %v385
        %467 = vmatprep.mubr.bf16.mxu0 %v427
        %468 = vmatmul.mubr.bf16.gmra.mrb[0].mxu0 %v426
        %v469 = vpop.f32.mrb[0].mxu0
        %v470 = vadd.f32 %v409, %v469
        %v471 = vpop.f32.mrb[0].mxu0
        %v472 = vadd.f32 %v409, %v471
        %v473 = vpop.f32.mrb[0].mxu0
        %v474 = vadd.f32 %v414, %v473
        %v475 = vpop.f32.mrb[0].mxu0
        %v476 = vadd.f32 %v414, %v475
        %477 = vdwg.mxu0
        %478 = vmatprep.subr.bf16.mxu0 %v397
        %479 = vmatpush1.bf16.msra.mxu0 %v396
        %480 = vmatprep.subr.bf16.mxu0 0
        %481 = vmatpush1.bf16.msra.mxu0 0
        %482 = vmatprep.subr.bf16.mxu0 0
        %483 = vmatpush1.bf16.msra.mxu0 0
        %484 = vmatprep.subr.bf16.mxu0 0
        %485 = vmatpush1.bf16.msra.mxu0 0
        %486 = vmatprep.subr.bf16.mxu0 0
        %487 = vmatpush1.bf16.msra.mxu0 0
        %488 = vmatprep.subr.bf16.mxu0 0
        %489 = vmatpush1.bf16.msra.mxu0 0
        %490 = vmatprep.subr.bf16.mxu0 0
        %491 = vmatpush1.bf16.msra.mxu0 0
        %492 = vmatprep.subr.bf16.mxu0 0
        %493 = vmatpush1.bf16.msra.mxu0 0
        %494 = vmatprep.subr.bf16.mxu0 0
        %495 = vmatpush1.bf16.msra.mxu0 0
        %496 = vmatprep.subr.bf16.mxu0 0
        %497 = vmatpush1.bf16.msra.mxu0 0
        %498 = vmatprep.subr.bf16.mxu0 0
        %499 = vmatpush1.bf16.msra.mxu0 0
        %500 = vmatprep.subr.bf16.mxu0 0
        %501 = vmatpush1.bf16.msra.mxu0 0
        %502 = vmatprep.subr.bf16.mxu0 0
        %503 = vmatpush1.bf16.msra.mxu0 0
        %504 = vmatprep.subr.bf16.mxu0 0
        %505 = vmatpush1.bf16.msra.mxu0 0
        %506 = vmatprep.subr.bf16.mxu0 0
        %507 = vmatpush1.bf16.msra.mxu0 0
        %508 = vmatprep.subr.bf16.mxu0 0
        %509 = vmatpush1.bf16.msra.mxu0 0
        %510 = vmatprep.mubr.bf16.mxu0 0
        %511 = vmatmul.mubr.bf16.gmra.mrb[0].mxu0 %v433
        %v512 = vpop.f32.mrb[0].mxu0
        %v513 = vadd.f32 %v470, %v512
        %v514 = vpop.f32.mrb[0].mxu0
        %v515 = vadd.f32 %v472, %v514
        %v516 = vpop.f32.mrb[0].mxu0
        %v517 = vadd.f32 %v474, %v516
        %v518 = vpop.f32.mrb[0].mxu0
        %v519 = vadd.f32 %v476, %v518
        %520 = vdwg.mxu0
        %v521 = vmax.f32 %v513, 0.0
        %v522 = vmax.f32 %v515, 0.0
        %v523 = vmax.f32 %v517, 0.0
        %v524 = vmax.f32 %v519, 0.0
        %v525 = vpack.c.bf16 %v523, %v521
        %v526 = vpack.c.bf16 %v524, %v522
        %529 = vrot.lane.b32.xlu0 %v525, 4
        %v530 = vpop.permute.xlu0 %529
        %531 = vrot.lane.b32.xlu0 %v526, 4
        %v532 = vpop.permute.xlu0 %531
        %vm533 = vcmask 31744
        %v534 = vsel %vm533, %v530, %v532
        %vm536 = vcmask 31744
        %v539 = vsel %vm536, 0, %v530
        %541 = vrot.lane.b32.xlu0 %v525, 68
        %v542 = vpop.permute.xlu0 %541
        %543 = vrot.lane.b32.xlu0 %v526, 68
        %v544 = vpop.permute.xlu0 %543
        %v545 = vsel %vm384, %v542, %v544
        %vm547 = vcmask 97280
        %v549 = vsel %vm547, %v544, 0
        %551 = vrot.lane.b32.xlu0 %v525, 124
        %v552 = vpop.permute.xlu0 %551
        %553 = vrot.lane.b32.xlu0 %v526, 124
        %v554 = vpop.permute.xlu0 %553
        %v555 = vsel %vm269, %v552, %v554
        %558 = vrot.lane.b32.xlu0 %v525, 120
        %v559 = vpop.permute.xlu0 %558
        %560 = vrot.lane.b32.xlu0 %v526, 120
        %v561 = vpop.permute.xlu0 %560
        %v562 = vsel %vm277, %v559, %v561
        %565 = vrot.lane.b32.xlu0 %v525, 116
        %v566 = vpop.permute.xlu0 %565
        %567 = vrot.lane.b32.xlu0 %v526, 116
        %v568 = vpop.permute.xlu0 %567
        %v569 = vsel %vm285, %v566, %v568
        %572 = vrot.lane.b32.xlu0 %v525, 112
        %v573 = vpop.permute.xlu0 %572
        %574 = vrot.lane.b32.xlu0 %v526, 112
        %v575 = vpop.permute.xlu0 %574
        %v576 = vsel %vm293, %v573, %v575
        %579 = vrot.lane.b32.xlu0 %v525, 108
        %v580 = vpop.permute.xlu0 %579
        %581 = vrot.lane.b32.xlu0 %v526, 108
        %v582 = vpop.permute.xlu0 %581
        %v583 = vsel %vm301, %v580, %v582
        %586 = vrot.lane.b32.xlu0 %v525, 104
        %v587 = vpop.permute.xlu0 %586
        %588 = vrot.lane.b32.xlu0 %v526, 104
        %v589 = vpop.permute.xlu0 %588
        %v590 = vsel %vm309, %v587, %v589
        %593 = vrot.lane.b32.xlu0 %v525, 100
        %v594 = vpop.permute.xlu0 %593
        %595 = vrot.lane.b32.xlu0 %v526, 100
        %v596 = vpop.permute.xlu0 %595
        %v597 = vsel %vm317, %v594, %v596
        %600 = vrot.lane.b32.xlu0 %v525, 96
        %v601 = vpop.permute.xlu0 %600
        %602 = vrot.lane.b32.xlu0 %v526, 96
        %v603 = vpop.permute.xlu0 %602
        %v604 = vsel %vm325, %v601, %v603
        %607 = vrot.lane.b32.xlu0 %v525, 92
        %v608 = vpop.permute.xlu0 %607
        %609 = vrot.lane.b32.xlu0 %v526, 92
        %v610 = vpop.permute.xlu0 %609
        %v611 = vsel %vm333, %v608, %v610
        %614 = vrot.lane.b32.xlu0 %v525, 88
        %v615 = vpop.permute.xlu0 %614
        %616 = vrot.lane.b32.xlu0 %v526, 88
        %v617 = vpop.permute.xlu0 %616
        %v618 = vsel %vm341, %v615, %v617
        %621 = vrot.lane.b32.xlu0 %v525, 84
        %v622 = vpop.permute.xlu0 %621
        %623 = vrot.lane.b32.xlu0 %v526, 84
        %v624 = vpop.permute.xlu0 %623
        %v625 = vsel %vm349, %v622, %v624
        %628 = vrot.lane.b32.xlu0 %v525, 80
        %v629 = vpop.permute.xlu0 %628
        %630 = vrot.lane.b32.xlu0 %v526, 80
        %v631 = vpop.permute.xlu0 %630
        %v632 = vsel %vm357, %v629, %v631
        %635 = vrot.lane.b32.xlu0 %v525, 76
        %v636 = vpop.permute.xlu0 %635
        %637 = vrot.lane.b32.xlu0 %v526, 76
        %v638 = vpop.permute.xlu0 %637
        %v639 = vsel %vm365, %v636, %v638
        %642 = vrot.lane.b32.xlu0 %v525, 72
        %v643 = vpop.permute.xlu0 %642
        %644 = vrot.lane.b32.xlu0 %v526, 72
        %v645 = vpop.permute.xlu0 %644
        %v646 = vsel %vm373, %v643, %v645
        %s649 = scalar_lea.vmem [#allocation2], 24
        %v650 = vld [vmem:[%s649] sm:$0xff]
        %v651 = vld [vmem:[%s649 + $0x8] sm:$0xf]
        %v652 = vld [vmem:[%s649 + $0xc] sm:$0xff]
        %v653 = vld [vmem:[%s649 + $0x14] sm:$0xf]
        %654 = vset.pattern.permute.xlu0 1
        %655 = vperm.xlu0 %654, %v404
        %v656 = vpop.permute.xlu0 %655
        %658 = vset.pattern.permute.xlu0 1
        %659 = vperm.xlu0 %658, %v405
        %v660 = vpop.permute.xlu0 %659
        %v666 = vunpack.c.l.b16 %v650
        %v667 = vunpack.c.h.b16 %v650
        %v668 = vunpack.c.l.b16 %v651
        %v669 = vunpack.c.l.b16 %v652
        %v670 = vunpack.c.h.b16 %v652
        %v671 = vunpack.c.l.b16 %v653
        %v672 = vpack.c.b16 %v669, %v666
        %v673 = vpack.c.b16 %v670, %v667
        %v674 = vpack.c.b16 %v671, %v668
        %v678 = vsel %vm431, %v674, 0
        %680 = vmatprep.subr.bf16.mxu0 %v534
        %681 = vmatpush1.bf16.msra.mxu0 %v539
        %682 = vmatprep.subr.bf16.mxu0 %v526
        %683 = vmatpush1.bf16.msra.mxu0 %v525
        %684 = vmatprep.subr.bf16.mxu0 %v554
        %685 = vmatpush1.bf16.msra.mxu0 %v555
        %686 = vmatprep.subr.bf16.mxu0 %v561
        %687 = vmatpush1.bf16.msra.mxu0 %v562
        %688 = vmatprep.subr.bf16.mxu0 %v568
        %689 = vmatpush1.bf16.msra.mxu0 %v569
        %690 = vmatprep.subr.bf16.mxu0 %v575
        %691 = vmatpush1.bf16.msra.mxu0 %v576
        %692 = vmatprep.subr.bf16.mxu0 %v582
        %693 = vmatpush1.bf16.msra.mxu0 %v583
        %694 = vmatprep.subr.bf16.mxu0 %v589
        %695 = vmatpush1.bf16.msra.mxu0 %v590
        %696 = vmatprep.subr.bf16.mxu0 %v596
        %697 = vmatpush1.bf16.msra.mxu0 %v597
        %698 = vmatprep.subr.bf16.mxu0 %v603
        %699 = vmatpush1.bf16.msra.mxu0 %v604
        %700 = vmatprep.subr.bf16.mxu0 %v610
        %701 = vmatpush1.bf16.msra.mxu0 %v611
        %702 = vmatprep.subr.bf16.mxu0 %v617
        %703 = vmatpush1.bf16.msra.mxu0 %v618
        %704 = vmatprep.subr.bf16.mxu0 %v624
        %705 = vmatpush1.bf16.msra.mxu0 %v625
        %706 = vmatprep.subr.bf16.mxu0 %v631
        %707 = vmatpush1.bf16.msra.mxu0 %v632
        %708 = vmatprep.subr.bf16.mxu0 %v638
        %709 = vmatpush1.bf16.msra.mxu0 %v639
        %710 = vmatprep.subr.bf16.mxu0 %v645
        %711 = vmatpush1.bf16.msra.mxu0 %v646
        %712 = vmatprep.mubr.bf16.mxu0 %v673
        %713 = vmatmul.mubr.bf16.gmra.mrb[0].mxu0 %v672
        %v714 = vpop.f32.mrb[0].mxu0
        %v715 = vadd.f32 %v656, %v714
        %v716 = vpop.f32.mrb[0].mxu0
        %v717 = vadd.f32 %v656, %v716
        %v718 = vpop.f32.mrb[0].mxu0
        %v719 = vadd.f32 %v660, %v718
        %v720 = vpop.f32.mrb[0].mxu0
        %v721 = vadd.f32 %v660, %v720
        %722 = vdwg.mxu0
        %723 = vmatprep.subr.bf16.mxu0 %v549
        %724 = vmatpush1.bf16.msra.mxu0 %v545
        %725 = vmatprep.subr.bf16.mxu0 0
        %726 = vmatpush1.bf16.msra.mxu0 0
        %727 = vmatprep.subr.bf16.mxu0 0
        %728 = vmatpush1.bf16.msra.mxu0 0
        %729 = vmatprep.subr.bf16.mxu0 0
        %730 = vmatpush1.bf16.msra.mxu0 0
        %731 = vmatprep.subr.bf16.mxu0 0
        %732 = vmatpush1.bf16.msra.mxu0 0
        %733 = vmatprep.subr.bf16.mxu0 0
        %734 = vmatpush1.bf16.msra.mxu0 0
        %735 = vmatprep.subr.bf16.mxu0 0
        %736 = vmatpush1.bf16.msra.mxu0 0
        %737 = vmatprep.subr.bf16.mxu0 0
        %738 = vmatpush1.bf16.msra.mxu0 0
        %739 = vmatprep.subr.bf16.mxu0 0
        %740 = vmatpush1.bf16.msra.mxu0 0
        %741 = vmatprep.subr.bf16.mxu0 0
        %742 = vmatpush1.bf16.msra.mxu0 0
        %743 = vmatprep.subr.bf16.mxu0 0
        %744 = vmatpush1.bf16.msra.mxu0 0
        %745 = vmatprep.subr.bf16.mxu0 0
        %746 = vmatpush1.bf16.msra.mxu0 0
        %747 = vmatprep.subr.bf16.mxu0 0
        %748 = vmatpush1.bf16.msra.mxu0 0
        %749 = vmatprep.subr.bf16.mxu0 0
        %750 = vmatpush1.bf16.msra.mxu0 0
        %751 = vmatprep.subr.bf16.mxu0 0
        %752 = vmatpush1.bf16.msra.mxu0 0
        %753 = vmatprep.subr.bf16.mxu0 0
        %754 = vmatpush1.bf16.msra.mxu0 0
        %755 = vmatprep.mubr.bf16.mxu0 0
        %756 = vmatmul.mubr.bf16.gmra.mrb[0].mxu0 %v678
        %v757 = vpop.f32.mrb[0].mxu0
        %v758 = vadd.f32 %v715, %v757
        %v759 = vpop.f32.mrb[0].mxu0
        %v760 = vadd.f32 %v717, %v759
        %v761 = vpop.f32.mrb[0].mxu0
        %v762 = vadd.f32 %v719, %v761
        %v763 = vpop.f32.mrb[0].mxu0
        %v764 = vadd.f32 %v721, %v763
        %765 = vdwg.mxu0
        %v766 = vand.u32 2147483647, %v758
        %v767 = vand.u32 2147483647, %v760
        %v768 = vand.u32 2147483647, %v762
        %v769 = vand.u32 2147483647, %v764
        %v770 = vpack.c.bf16 %v768, %v766
        %v771 = vpack.c.bf16 %v769, %v767
        %v772 = vld [vmem:[%s4] sm:$0xf]
        %v773 = vld [vmem:[%s4 + $0x4] sm:$0xf]
        %v774 = vld [vmem:[%s4 + $0x8] sm:$0xf]
        %v775 = vld [vmem:[%s4 + $0xc] sm:$0xf]
        %v776 = vld [vmem:[%s4 + $0x10] sm:$0xf]
        %v777 = vld [vmem:[%s4 + $0x14] sm:$0xf]
        %v778 = vld [vmem:[%s4 + $0x18] sm:$0xf]
        %v779 = vld [vmem:[%s4 + $0x1c] sm:$0xf]
        %v780 = vld [vmem:[%s4 + $0x20] sm:$0xf]
        %v781 = vld [vmem:[%s4 + $0x24] sm:$0xf]
        %v782 = vld [vmem:[%s4 + $0x28] sm:$0xf]
        %v783 = vld [vmem:[%s4 + $0x2c] sm:$0xf]
        %v784 = vld [vmem:[%s4 + $0x30] sm:$0xf]
        %v785 = vld [vmem:[%s4 + $0x34] sm:$0xf]
        %v786 = vld [vmem:[%s4 + $0x38] sm:$0xf]
        %v787 = vld [vmem:[%s4 + $0x3c] sm:$0xf]
        %v788 = vld [vmem:[%s4 + $0x40] sm:$0xf]
        %v789 = vld [vmem:[%s4 + $0x44] sm:$0xf]
        %v808 = vunpack.c.l.b16 %v772
        %v809 = vunpack.c.l.b16 %v773
        %v810 = vunpack.c.l.b16 %v774
        %v811 = vunpack.c.l.b16 %v775
        %v812 = vunpack.c.l.b16 %v776
        %v813 = vunpack.c.l.b16 %v777
        %v814 = vunpack.c.l.b16 %v778
        %v815 = vunpack.c.l.b16 %v779
        %v816 = vunpack.c.l.b16 %v780
        %v817 = vunpack.c.l.b16 %v781
        %v818 = vunpack.c.l.b16 %v782
        %v819 = vunpack.c.l.b16 %v783
        %v820 = vunpack.c.l.b16 %v784
        %v821 = vunpack.c.l.b16 %v785
        %v822 = vunpack.c.l.b16 %v786
        %v823 = vunpack.c.l.b16 %v787
        %v824 = vunpack.c.l.b16 %v788
        %v825 = vunpack.c.l.b16 %v789
        %v826 = vpack.c.b16 %v809, %v808
        %v827 = vpack.c.b16 %v811, %v810
        %v828 = vpack.c.b16 %v813, %v812
        %v829 = vpack.c.b16 %v815, %v814
        %v830 = vpack.c.b16 %v817, %v816
        %v831 = vpack.c.b16 %v819, %v818
        %v832 = vpack.c.b16 %v821, %v820
        %v833 = vpack.c.b16 %v823, %v822
        %v834 = vpack.c.b16 %v825, %v824
        %v845 = vsel %vm431, %v771, 0
        %847 = vmatprep.subr.bf16.mxu0 0
        %848 = vmatpush1.bf16.msra.mxu0 %v826
        %849 = vmatprep.subr.bf16.mxu0 0
        %850 = vmatpush1.bf16.msra.mxu0 %v827
        %851 = vmatprep.subr.bf16.mxu0 0
        %852 = vmatpush1.bf16.msra.mxu0 %v828
        %853 = vmatprep.subr.bf16.mxu0 0
        %854 = vmatpush1.bf16.msra.mxu0 %v829
        %855 = vmatprep.subr.bf16.mxu0 0
        %856 = vmatpush1.bf16.msra.mxu0 %v830
        %857 = vmatprep.subr.bf16.mxu0 0
        %858 = vmatpush1.bf16.msra.mxu0 %v831
        %859 = vmatprep.subr.bf16.mxu0 0
        %860 = vmatpush1.bf16.msra.mxu0 %v832
        %861 = vmatprep.subr.bf16.mxu0 0
        %862 = vmatpush1.bf16.msra.mxu0 %v833
        %863 = vmatprep.subr.bf16.mxu0 0
        %864 = vmatpush1.bf16.msra.mxu0 %v834
        %865 = vmatprep.subr.bf16.mxu0 0
        %866 = vmatpush1.bf16.msra.mxu0 0
        %867 = vmatprep.subr.bf16.mxu0 0
        %868 = vmatpush1.bf16.msra.mxu0 0
        %869 = vmatprep.subr.bf16.mxu0 0
        %870 = vmatpush1.bf16.msra.mxu0 0
        %871 = vmatprep.subr.bf16.mxu0 0
        %872 = vmatpush1.bf16.msra.mxu0 0
        %873 = vmatprep.subr.bf16.mxu0 0
        %874 = vmatpush1.bf16.msra.mxu0 0
        %875 = vmatprep.subr.bf16.mxu0 0
        %876 = vmatpush1.bf16.msra.mxu0 0
        %877 = vmatprep.subr.bf16.mxu0 0
        %878 = vmatpush1.bf16.msra.mxu0 0
        %879 = vmatprep.mubr.bf16.mxu0 %v845
        %880 = vmatmul.mubr.bf16.gmra.mrb[0].mxu0 %v770
        %v881 = vpop.f32.mrb[0].mxu0
        %v882 = vadd.f32 0.0, %v881
        %v883 = vpop.f32.mrb[0].mxu0
        %v884 = vpop.f32.mrb[0].mxu0
        %v885 = vadd.f32 0.0, %v884
        %v886 = vpop.f32.mrb[0].mxu0
        %887 = vdwg.mxu0
        %v888 = vmul.f32 %v882, 0.027777778
        %v889 = vmul.f32 %v885, 0.027777778
        %v890 = vld [vmem:[#allocation5] sm:$0xf]
        %v891 = vld [vmem:[#allocation5 + $0x4] sm:$0xf]
        %v892 = vpack.c.bf16 %v889, %v888
        %893 = vset.pattern.permute.xlu0 2
        %894 = vperm.xlu0 %893, %v404
        %v895 = vpop.permute.xlu0 %894
        %897 = vset.pattern.permute.xlu0 2
        %898 = vperm.xlu0 %897, %v405
        %v899 = vpop.permute.xlu0 %898
        %v903 = vunpack.c.l.b16 %v890
        %v904 = vunpack.c.l.b16 %v891
        %v905 = vpack.c.b16 %v904, %v903
        %v907 = vsel %vm431, %v905, 0
        %909 = vmatprep.subr.bf16.mxu0 0
        %910 = vmatpush1.bf16.msra.mxu0 %v892
        %911 = vmatprep.subr.bf16.mxu0 0
        %912 = vmatpush1.bf16.msra.mxu0 0
        %913 = vmatprep.subr.bf16.mxu0 0
        %914 = vmatpush1.bf16.msra.mxu0 0
        %915 = vmatprep.subr.bf16.mxu0 0
        %916 = vmatpush1.bf16.msra.mxu0 0
        %917 = vmatprep.subr.bf16.mxu0 0
        %918 = vmatpush1.bf16.msra.mxu0 0
        %919 = vmatprep.subr.bf16.mxu0 0
        %920 = vmatpush1.bf16.msra.mxu0 0
        %921 = vmatprep.subr.bf16.mxu0 0
        %922 = vmatpush1.bf16.msra.mxu0 0
        %923 = vmatprep.subr.bf16.mxu0 0
        %924 = vmatpush1.bf16.msra.mxu0 0
        %925 = vmatprep.subr.bf16.mxu0 0
        %926 = vmatpush1.bf16.msra.mxu0 0
        %927 = vmatprep.subr.bf16.mxu0 0
        %928 = vmatpush1.bf16.msra.mxu0 0
        %929 = vmatprep.subr.bf16.mxu0 0
        %930 = vmatpush1.bf16.msra.mxu0 0
        %931 = vmatprep.subr.bf16.mxu0 0
        %932 = vmatpush1.bf16.msra.mxu0 0
        %933 = vmatprep.subr.bf16.mxu0 0
        %934 = vmatpush1.bf16.msra.mxu0 0
        %935 = vmatprep.subr.bf16.mxu0 0
        %936 = vmatpush1.bf16.msra.mxu0 0
        %937 = vmatprep.subr.bf16.mxu0 0
        %938 = vmatpush1.bf16.msra.mxu0 0
        %939 = vmatprep.subr.bf16.mxu0 0
        %940 = vmatpush1.bf16.msra.mxu0 0
        %941 = vmatprep.mubr.bf16.mxu0 0
        %942 = vmatmul.mubr.bf16.gmra.mrb[0].mxu0 %v907
        %v943 = vpop.f32.mrb[0].mxu0
        %v944 = vadd.f32 %v895, %v943
        %v945 = vpop.f32.mrb[0].mxu0
        %v946 = vpop.f32.mrb[0].mxu0
        %v947 = vadd.f32 %v899, %v946
        %v948 = vpop.f32.mrb[0].mxu0
        %949 = vdwg.mxu0
        %v950 = vmax.f32 %v944, 0.0
        %v951 = vmax.f32 %v947, 0.0
        %s952 = scalar_lea.vmem [#allocation5], 8
        %v953 = vld [vmem:[%s952] sm:$0xf]
        %v954 = vld [vmem:[%s952 + $0x4] sm:$0xf]
        %v955 = vpack.c.bf16 %v951, %v950
        %956 = vset.pattern.permute.xlu0 3
        %957 = vperm.xlu0 %956, %v404
        %v958 = vpop.permute.xlu0 %957
        %960 = vset.pattern.permute.xlu0 3
        %961 = vperm.xlu0 %960, %v405
        %v962 = vpop.permute.xlu0 %961
        %v966 = vunpack.c.l.b16 %v953
        %v967 = vunpack.c.l.b16 %v954
        %v968 = vpack.c.b16 %v967, %v966
        %v970 = vsel %vm431, %v968, 0
        %972 = vmatprep.subr.bf16.mxu0 0
        %973 = vmatpush1.bf16.msra.mxu0 %v955
        %974 = vmatprep.subr.bf16.mxu0 0
        %975 = vmatpush1.bf16.msra.mxu0 0
        %976 = vmatprep.subr.bf16.mxu0 0
        %977 = vmatpush1.bf16.msra.mxu0 0
        %978 = vmatprep.subr.bf16.mxu0 0
        %979 = vmatpush1.bf16.msra.mxu0 0
        %980 = vmatprep.subr.bf16.mxu0 0
        %981 = vmatpush1.bf16.msra.mxu0 0
        %982 = vmatprep.subr.bf16.mxu0 0
        %983 = vmatpush1.bf16.msra.mxu0 0
        %984 = vmatprep.subr.bf16.mxu0 0
        %985 = vmatpush1.bf16.msra.mxu0 0
        %986 = vmatprep.subr.bf16.mxu0 0
        %987 = vmatpush1.bf16.msra.mxu0 0
        %988 = vmatprep.subr.bf16.mxu0 0
        %989 = vmatpush1.bf16.msra.mxu0 0
        %990 = vmatprep.subr.bf16.mxu0 0
        %991 = vmatpush1.bf16.msra.mxu0 0
        %992 = vmatprep.subr.bf16.mxu0 0
        %993 = vmatpush1.bf16.msra.mxu0 0
        %994 = vmatprep.subr.bf16.mxu0 0
        %995 = vmatpush1.bf16.msra.mxu0 0
        %996 = vmatprep.subr.bf16.mxu0 0
        %997 = vmatpush1.bf16.msra.mxu0 0
        %998 = vmatprep.subr.bf16.mxu0 0
        %999 = vmatpush1.bf16.msra.mxu0 0
        %1000 = vmatprep.subr.bf16.mxu0 0
        %1001 = vmatpush1.bf16.msra.mxu0 0
        %1002 = vmatprep.subr.bf16.mxu0 0
        %1003 = vmatpush1.bf16.msra.mxu0 0
        %1004 = vmatprep.mubr.bf16.mxu0 0
        %1005 = vmatmul.mubr.bf16.gmra.mrb[0].mxu0 %v970
        %v1006 = vpop.f32.mrb[0].mxu0
        %v1007 = vadd.f32 %v958, %v1006
        %v1008 = vpop.f32.mrb[0].mxu0
        %v1009 = vpop.f32.mrb[0].mxu0
        %v1010 = vadd.f32 %v962, %v1009
        %v1011 = vpop.f32.mrb[0].mxu0
        %1012 = vdwg.mxu0
        %v1013 = vxor.u32 %v1007, 2147483648
        %v1014 = vxor.u32 %v1010, 2147483648
        %v1015 = vmul.f32 %v1013, 1.442695
        %v1016 = vpow.pop %v1015
        %v1017 = vmul.f32 %v1014, 1.442695
        %v1018 = vpow.pop %v1017
        %v1019 = vadd.f32 %v1016, 1.0
        %v1020 = vadd.f32 %v1018, 1.0
        %v1021 = vrcp.pop %v1019
        %v1022 = vmul.f32 1.0, %v1021
        %v1023 = vrcp.pop %v1020
        %v1024 = vmul.f32 1.0, %v1023
        %v1025 = vmul.f32 %v888, %v1022
        %v1026 = vmul.f32 %v889, %v1024
        %1029 = vrot.lane.b32.xlu0 %v1025, 4
        %v1030 = vpop.permute.xlu0 %1029
        %1031 = vrot.lane.b32.xlu0 %v1026, 4
        %v1032 = vpop.permute.xlu0 %1031
        %v1035 = vsel %vm536, %v1025, %v1030
        %v1036 = vsel %vm536, %v1026, %v1032
        %1039 = vrot.lane.b32.xlu0 %v1035, 8
        %v1040 = vpop.permute.xlu0 %1039
        %1041 = vrot.lane.b32.xlu0 %v1036, 8
        %v1042 = vpop.permute.xlu0 %1041
        %vm1045 = vcmask 64512
        %v1046 = vsel %vm1045, %v1035, %v1040
        %v1047 = vsel %vm1045, %v1036, %v1042
        %1050 = vrot.lane.b32.xlu0 %v1046, 16
        %v1051 = vpop.permute.xlu0 %1050
        %1052 = vrot.lane.b32.xlu0 %v1047, 16
        %v1053 = vpop.permute.xlu0 %1052
        %v1056 = vsel %vm431, %v1046, %v1051
        %v1057 = vsel %vm431, %v1047, %v1053
        %1060 = vrot.lane.b32.xlu0 %v1056, 32
        %v1061 = vpop.permute.xlu0 %1060
        %1062 = vrot.lane.b32.xlu0 %v1057, 32
        %v1063 = vpop.permute.xlu0 %1062
        %vm1066 = vcmask 261120
        %v1067 = vsel %vm1066, %v1056, %v1061
        %v1068 = vsel %vm1066, %v1057, %v1063
        %1071 = vrot.lane.b32.xlu0 %v1067, 64
        %v1072 = vpop.permute.xlu0 %1071
        %1073 = vrot.lane.b32.xlu0 %v1068, 64
        %v1074 = vpop.permute.xlu0 %1073
        %vm1077 = vcmask 523264
        %v1078 = vsel %vm1077, %v1067, %v1072
        %v1079 = vsel %vm1077, %v1068, %v1074
        %v1080 = vsub.f32 %v758, %v1078
        %v1081 = vsub.f32 %v760, %v1078
        %v1082 = vsub.f32 %v762, %v1079
        %v1083 = vsub.f32 %v764, %v1079
        %v1084 = vmul.f32 %v1080, %v1080
        %v1085 = vmul.f32 %v1081, %v1081
        %v1086 = vmul.f32 %v1082, %v1082
        %v1087 = vmul.f32 %v1083, %v1083
        %v1088 = vadd.f32 %v1084, 0.003
        %v1089 = vadd.f32 %v1085, 0.003
        %v1090 = vadd.f32 %v1086, 0.003
        %v1091 = vadd.f32 %v1087, 0.003
        %v1092 = vrsqrt.pop %v1088
        %v1093 = vmul.f32 %v1088, %v1092
        %vm1094 = vcmp.eq.f32.partialorder %v1088, inf
        %v1095 = vsel %vm1094, %v1088, %v1093
        %vm1096 = vcmp.eq.f32.partialorder %v1088, 0.0
        %v1097 = vand.u32 %v1088, 2147483648
        %v1098 = vsel %vm1096, %v1097, %v1095
        %v1099 = vrsqrt.pop %v1089
        %v1100 = vmul.f32 %v1089, %v1099
        %vm1101 = vcmp.eq.f32.partialorder %v1089, inf
        %v1102 = vsel %vm1101, %v1089, %v1100
        %vm1103 = vcmp.eq.f32.partialorder %v1089, 0.0
        %v1104 = vand.u32 %v1089, 2147483648
        %v1105 = vsel %vm1103, %v1104, %v1102
        %v1106 = vrsqrt.pop %v1090
        %v1107 = vmul.f32 %v1090, %v1106
        %vm1108 = vcmp.eq.f32.partialorder %v1090, inf
        %v1109 = vsel %vm1108, %v1090, %v1107
        %vm1110 = vcmp.eq.f32.partialorder %v1090, 0.0
        %v1111 = vand.u32 %v1090, 2147483648
        %v1112 = vsel %vm1110, %v1111, %v1109
        %v1113 = vrsqrt.pop %v1091
        %v1114 = vmul.f32 %v1091, %v1113
        %vm1115 = vcmp.eq.f32.partialorder %v1091, inf
        %v1116 = vsel %vm1115, %v1091, %v1114
        %vm1117 = vcmp.eq.f32.partialorder %v1091, 0.0
        %v1118 = vand.u32 %v1091, 2147483648
        %v1119 = vsel %vm1117, %v1118, %v1116
        %v1120 = vadd.f32 %v758, %v1078
        %v1121 = vadd.f32 %v760, %v1078
        %v1122 = vadd.f32 %v762, %v1079
        %v1123 = vadd.f32 %v764, %v1079
        %v1124 = vmul.f32 %v1120, %v1120
        %v1125 = vmul.f32 %v1121, %v1121
        %v1126 = vmul.f32 %v1122, %v1122
        %v1127 = vmul.f32 %v1123, %v1123
        %v1128 = vadd.f32 %v1124, 0.003
        %v1129 = vadd.f32 %v1125, 0.003
        %v1130 = vadd.f32 %v1126, 0.003
        %v1131 = vadd.f32 %v1127, 0.003
        %v1132 = vrsqrt.pop %v1128
        %v1133 = vmul.f32 %v1128, %v1132
        %vm1134 = vcmp.eq.f32.partialorder %v1128, inf
        %v1135 = vsel %vm1134, %v1128, %v1133
        %vm1136 = vcmp.eq.f32.partialorder %v1128, 0.0
        %v1137 = vand.u32 %v1128, 2147483648
        %v1138 = vsel %vm1136, %v1137, %v1135
        %v1139 = vrsqrt.pop %v1129
        %v1140 = vmul.f32 %v1129, %v1139
        %vm1141 = vcmp.eq.f32.partialorder %v1129, inf
        %v1142 = vsel %vm1141, %v1129, %v1140
        %vm1143 = vcmp.eq.f32.partialorder %v1129, 0.0
        %v1144 = vand.u32 %v1129, 2147483648
        %v1145 = vsel %vm1143, %v1144, %v1142
        %v1146 = vrsqrt.pop %v1130
        %v1147 = vmul.f32 %v1130, %v1146
        %vm1148 = vcmp.eq.f32.partialorder %v1130, inf
        %v1149 = vsel %vm1148, %v1130, %v1147
        %vm1150 = vcmp.eq.f32.partialorder %v1130, 0.0
        %v1151 = vand.u32 %v1130, 2147483648
        %v1152 = vsel %vm1150, %v1151, %v1149
        %v1153 = vrsqrt.pop %v1131
        %v1154 = vmul.f32 %v1131, %v1153
        %vm1155 = vcmp.eq.f32.partialorder %v1131, inf
        %v1156 = vsel %vm1155, %v1131, %v1154
        %vm1157 = vcmp.eq.f32.partialorder %v1131, 0.0
        %v1158 = vand.u32 %v1131, 2147483648
        %v1159 = vsel %vm1157, %v1158, %v1156
        %v1160 = vsub.f32 %v1098, %v1138
        %v1161 = vsub.f32 %v1105, %v1145
        %v1162 = vsub.f32 %v1112, %v1152
        %v1163 = vsub.f32 %v1119, %v1159
        %v1164 = vmul.f32 %v1160, 0.5
        %v1165 = vmul.f32 %v1161, 0.5
        %v1166 = vmul.f32 %v1162, 0.5
        %v1167 = vmul.f32 %v1163, 0.5
        %v1168 = vadd.f32 %v758, %v1164
        %v1169 = vadd.f32 %v760, %v1165
        %v1170 = vadd.f32 %v762, %v1166
        %v1171 = vadd.f32 %v764, %v1167
        %1176 = vrot.lane.b32.xlu0 %v1168, 4
        %v1177 = vpop.permute.xlu0 %1176
        %1178 = vrot.lane.b32.xlu0 %v1169, 4
        %v1179 = vpop.permute.xlu0 %1178
        %1180 = vrot.lane.b32.xlu0 %v1170, 4
        %v1181 = vpop.permute.xlu0 %1180
        %1182 = vrot.lane.b32.xlu0 %v1171, 4
        %v1183 = vpop.permute.xlu0 %1182
        %v1184 = vsel %vm536, %v1177, %v1179
        %v1185 = vsel %vm536, %v1181, %v1183
        %v1190 = vadd.f32 %v254, %v1177
        %v1191 = vadd.f32 %v255, %v1184
        %v1192 = vadd.f32 %v257, %v1181
        %v1193 = vadd.f32 %v258, %v1185
        %v1194 = vmax.f32 %v1190, 0.0
        %v1195 = vmax.f32 %v1191, 0.0
        %v1196 = vmax.f32 %v1192, 0.0
        %v1197 = vmax.f32 %v1193, 0.0
        %1202 = vrot.lane.b32.xlu0 %v1194, 124
        %v1203 = vpop.permute.xlu0 %1202
        %1204 = vrot.lane.b32.xlu0 %v1195, 124
        %v1205 = vpop.permute.xlu0 %1204
        %1206 = vrot.lane.b32.xlu0 %v1196, 124
        %v1207 = vpop.permute.xlu0 %1206
        %1208 = vrot.lane.b32.xlu0 %v1197, 124
        %v1209 = vpop.permute.xlu0 %1208
        %vm1210 = vcmask 1014784
        %v1211 = vsel %vm1210, %v1203, %v1205
        %v1212 = vsel %vm1210, %v1207, %v1209
        %1217 = vst [vmem:[%s247] sm:$0xff] %v1211
        %1218 = vst.msk [vmem:[%s247 + $0x8] sm:$0xff] %vm431, %v1205
        %1219 = vst [vmem:[%s247 + $0x10] sm:$0xff] %v1212
        %1220 = vst.msk [vmem:[%s247 + $0x18] sm:$0xff] %vm431, %v1209
        %s1221 = sand.u32 %s139, 1
        %s1222 = scalar_lea.sflag [#allocation4], %s1221
        %s1223 = sand.u32 %s139, 1
        %s1224 = smul.addr %s1223, 32
        %s1225 = scalar_lea.vmem [#allocation7], %s1224
        // Predicated region
        $region49: #{tpu_custom_call.1} parent=39 // pred_check
          %p1226 = pneg %p149
        $region50: #{tpu_custom_call.1} parent=39 // pred_check_branch
          %1228 = sbr.rel (%p1226) target = $region52
        $region51: #{tpu_custom_call.1} parent=39 // pred_region
          %s1230 = ssub.s32 512, 512
          %1231 = vsyncadd %s1222, %s1230
          %s1232 = smul.addr %s21, 4
          %s1233 = smul.addr %s1232, 128
          %s1234 = scalar_lea.hbm %s5, %s1233
          %s1235 = sshll.u32 %s1225, 4
          %s1236 = int_to_ptr.vmem [resolvable:$true] %s1235
          %1241 = dma.vmem_to_hbm [thread:$0]  %s1236, 512, %s1234, %s1222, 256, 256, 16
        $region52: #{tpu_custom_call.1} parent=39 // pred_fallthru
          _
      $region40: #{tpu_custom_call.1} parent=5 // pred_fallthru
        _
      %p1242 = scmp.le.s32.totalorder 2, %s16
      // Predicated region
      $region53: #{tpu_custom_call.1} parent=5 // pred_check
        %p1243 = pneg %p1242
      $region54: #{tpu_custom_call.1} parent=5 // pred_check_branch
        %1245 = sbr.rel (%p1243) target = $region56
      $region55: #{tpu_custom_call.1} parent=5 // pred_region
        %s1246 = ssub.s32 %s16, 2
        // Predicated region
        $region57: #{tpu_custom_call.1} parent=55 // pred_check
          %p1247 = pneg %p155
        $region58: #{tpu_custom_call.1} parent=55 // pred_check_branch
          %1249 = sbr.rel (%p1247) target = $region60
        $region59: #{tpu_custom_call.1} parent=55 // pred_region
          %s1250 = sand.u32 %s140, 1
          %s1251 = scalar_lea.sflag [#allocation4], %s1250
          %s1252 = sand.u32 %s140, 1
          %s1253 = smul.addr %s1252, 32
          %s1254 = scalar_lea.vmem [#allocation7], %s1253
          %1255 = dma.done %s1251, 512
        $region60: #{tpu_custom_call.1} parent=55 // pred_fallthru
          _
      $region56: #{tpu_custom_call.1} parent=5 // pred_fallthru
        _
    $region6: #{tpu_custom_call.1} parent=1 // loop_footer
      %s20 = sadd.s32 1, %s16
    $region7: #{tpu_custom_call.1} parent=1 // loop_footer_branch
      %15 = sbr.rel target = $region3
    $region8: #{tpu_custom_call.1} parent=1 // loop_exit
      _
    %1256 = vsyncpa [#allocation3], 1
    %s1257 = scalar_lea.sflag [#allocation3], 1
    %1258 = vsyncpa %s1257, 1
    %1259 = vsyncpa [#allocation6], 1
    %1260 = vsyncpa [#allocation4], 1
    %s1261 = scalar_lea.sflag [#allocation4], 1
    %1262 = vsyncpa %s1261, 1

</llo_original>
